<compile_context>
chip_gen: v5e
topology: v5e:2x2
jax: 0.10.0
libtpu: 0.0.40
codegen_flags: <defaults>
</compile_context>

<pallas_src>
import numpy as np
import jax
import jax.numpy as jnp
from jax.experimental import pallas as pl
from jax.experimental.pallas import tpu as pltpu

D_IN = 3
NUM_FREQ = 10
INCLUDE_INPUT = True
# log_sampling=True -> 2 ** linspace(0, num_freq-1, num_freq) = exact powers of 2
FREQ_BANDS = tuple(float(f) for f in (2.0 ** np.linspace(0.0, NUM_FREQ - 1, NUM_FREQ)))
NUM_FNS = (1 if INCLUDE_INPUT else 0) + 2 * NUM_FREQ   # 21
OUT_DIM = NUM_FNS * D_IN                               # 63

ROW_PACK = 2                        # x-rows packed per kernel row (lane density)
IN_LANES = ROW_PACK * D_IN          # 6
OUT_LANES = ROW_PACK * OUT_DIM      # 126  (98% of a 128-lane vreg)
W_ROWS = 8                          # 6 pick/scale rows + sin mask + identity mask
TARGET_TILE_R = 2048                # kernel rows per grid step (multiple of 8)


def _round_up(x, m):
    return (x + m - 1) // m * m


def _build_weight_table():
    """(8, 126) f32 table.

    Rows 0..5: w[src, q] = scale so that t[:, q] = scale * x_packed[:, src]
               reproduces x (identity columns) or f_k * x (trig columns).
    Row 6:     1.0 on sin columns, 0.0 elsewhere.
    Row 7:     1.0 on identity columns, 0.0 elsewhere.
    """
    w = np.zeros((W_ROWS, OUT_LANES), np.float32)
    for r in range(ROW_PACK):
        for k in range(NUM_FNS):
            for j in range(D_IN):
                q = OUT_DIM * r + D_IN * k + j       # output lane
                src = D_IN * r + j                   # packed-input lane
                if INCLUDE_INPUT and k == 0:
                    w[src, q] = 1.0
                    w[W_ROWS - 1, q] = 1.0           # identity mask
                else:
                    kk = k - (1 if INCLUDE_INPUT else 0)
                    w[src, q] = FREQ_BANDS[kk // 2]  # exact power of two
                    if kk % 2 == 0:
                        w[W_ROWS - 2, q] = 1.0       # sin mask
    return w


_W_TABLE = _build_weight_table()


def pe_kernel(w_ref, x_ref, o_ref):
    """x_ref: (tile_r, 6) packed inputs -> o_ref: (tile_r, 126) packed outputs."""
    w = w_ref[...]                                   # (8, 126) constant table
    x = x_ref[...]                                   # (tile_r, 6)
    # t[:, 63*r + 3*k + j] = scale_k * x[:, 3*r + j]  (scale = 1 on identity lanes)
    t = x[:, 0:1] * w[0:1, :]
    for s in range(1, IN_LANES):                     # unrolled at trace time
        t = t + x[:, s:s + 1] * w[s:s + 1, :]
    sin_mask = w[W_ROWS - 2:W_ROWS - 1, :] > 0.5     # (1, 126)
    id_mask = w[W_ROWS - 1:W_ROWS, :] > 0.5          # (1, 126)
    trig = jnp.where(sin_mask, jnp.sin(t), jnp.cos(t))
    o_ref[...] = jnp.where(id_mask, t, trig)


def pe_forward_pallas(z, target_tile_r=TARGET_TILE_R):
    """z: (N, 3) float32  ->  (N, 63) float32, identical to PE().forward(z)."""
    n, d = z.shape
    assert d == D_IN
    zf = jnp.asarray(z, jnp.float32)

    # Kernel rows needed (2 x-rows per kernel row), 8-sublane aligned.
    r_need = _round_up(max(-(-n // ROW_PACK), 1), 8)
    # Force >= 2 grid steps when there are >= 2 tiles worth of rows (v7x megacore).
    grid = max(pl.cdiv(r_need, target_tile_r), 2 if r_need >= 16 else 1)
    tile_r = _round_up(-(-r_need // grid), 8)
    r_pad = grid * tile_r
    n_pad = r_pad * ROW_PACK

    if n_pad != n:
        zf = jnp.pad(zf, ((0, n_pad - n), (0, 0)))
    x_packed = zf.reshape(r_pad, IN_LANES)           # free row-major reshape

    out_packed = pl.pallas_call(
        pe_kernel,
        out_shape=jax.ShapeDtypeStruct((r_pad, OUT_LANES), jnp.float32),
        grid=(grid,),
        in_specs=[
            pl.BlockSpec((W_ROWS, OUT_LANES), lambda i: (0, 0)),   # constant table
            pl.BlockSpec((tile_r, IN_LANES), lambda i: (i, 0)),
        ],
        out_specs=pl.BlockSpec((tile_r, OUT_LANES), lambda i: (i, 0)),
        compiler_params=pltpu.CompilerParams(
            dimension_semantics=("parallel",)),
    )(jnp.asarray(_W_TABLE), x_packed)

    out = out_packed.reshape(n_pad, OUT_DIM)         # free row-major reshape
    if n_pad == n:
        return out
    # TODO(synk): for ragged N this prefix slice is one extra XLA copy; callers
    # with N % (ROW_PACK * tile_r) == 0 skip it entirely.
    return out[:n]


def pe_forward_ref(z):
    """Pure-JAX mirror of the PyTorch PE.forward (for correctness check)."""
    zf = jnp.asarray(z, jnp.float32)
    pieces = [zf] if INCLUDE_INPUT else []
    for f in FREQ_BANDS:
        pieces.append(jnp.sin(zf * f))
        pieces.append(jnp.cos(zf * f))
    return jnp.concatenate(pieces, axis=-1)


# NOTE: PE.get_cosine_easing_window / cosine_easing_window are host-side scalar
# helpers not used by forward() (and depend on an undefined self.window_curve);
# they are intentionally not kernelized.

if __name__ == "__main__":
    key = jax.random.PRNGKey(0)
    # N=200: ragged, multi-tile, grid=2 path.  N=16: exact-fit, grid=1 path.
    for n in (200, 16):
        z = jax.random.uniform(jax.random.fold_in(key, n), (n, D_IN),
                               jnp.float32, minval=-np.pi, maxval=np.pi)
        out = jax.block_until_ready(pe_forward_pallas(z))
        ref = jax.block_until_ready(pe_forward_ref(z))
        assert out.shape == (n, OUT_DIM) and out.dtype == jnp.float32
        np.testing.assert_allclose(np.asarray(out), np.asarray(ref),
                                   rtol=1e-4, atol=1e-4)
    print("KERNEL_OK")
</pallas_src>

<mosaic_0001>
module attributes {stable_mosaic.version = 11 : i64} {
  func.func @pe_kernel(%arg0: i32, %arg1: memref<8x126xf32, #tpu.memory_space<vmem>>, %arg2: memref<56x6xf32, #tpu.memory_space<vmem>>, %arg3: memref<56x126xf32, #tpu.memory_space<vmem>>) attributes {dimension_semantics = [#tpu.dimension_semantics<parallel>], iteration_bounds = array<i64: 2>, scalar_prefetch = 0 : i64, scratch_operands = 0 : i64, tpu.core_type = #tpu.core_type<tc>, window_params = [{pipeline_mode = #tpu.pipeline_mode<synchronous>, transform_indices = @transform_0, window_bounds = array<i64: 8, 126>}, {transform_indices = @transform_1, window_bounds = array<i64: 56, 6>}, {transform_indices = @transform_2, window_bounds = array<i64: 56, 126>}]} {
    %c0 = arith.constant 0 : index
    %c0_0 = arith.constant 0 : index
    %0 = vector.load %arg1[%c0, %c0_0] : memref<8x126xf32, #tpu.memory_space<vmem>>, vector<8x126xf32>
    %c0_1 = arith.constant 0 : index
    %c0_2 = arith.constant 0 : index
    %1 = vector.load %arg2[%c0_1, %c0_2] : memref<56x6xf32, #tpu.memory_space<vmem>>, vector<56x6xf32>
    %2 = vector.extract_strided_slice %1 {offsets = [0, 0], sizes = [56, 1], strides = [1, 1]} : vector<56x6xf32> to vector<56x1xf32>
    %3 = vector.extract_strided_slice %0 {offsets = [0, 0], sizes = [1, 126], strides = [1, 1]} : vector<8x126xf32> to vector<1x126xf32>
    %4 = vector.broadcast %2 : vector<56x1xf32> to vector<56x126xf32>
    %5 = vector.broadcast %3 : vector<1x126xf32> to vector<56x126xf32>
    %6 = arith.mulf %4, %5 : vector<56x126xf32>
    %7 = vector.extract_strided_slice %1 {offsets = [0, 1], sizes = [56, 1], strides = [1, 1]} : vector<56x6xf32> to vector<56x1xf32>
    %8 = vector.extract_strided_slice %0 {offsets = [1, 0], sizes = [1, 126], strides = [1, 1]} : vector<8x126xf32> to vector<1x126xf32>
    %9 = vector.broadcast %7 : vector<56x1xf32> to vector<56x126xf32>
    %10 = vector.broadcast %8 : vector<1x126xf32> to vector<56x126xf32>
    %11 = arith.mulf %9, %10 : vector<56x126xf32>
    %12 = arith.addf %6, %11 : vector<56x126xf32>
    %13 = vector.extract_strided_slice %1 {offsets = [0, 2], sizes = [56, 1], strides = [1, 1]} : vector<56x6xf32> to vector<56x1xf32>
    %14 = vector.extract_strided_slice %0 {offsets = [2, 0], sizes = [1, 126], strides = [1, 1]} : vector<8x126xf32> to vector<1x126xf32>
    %15 = vector.broadcast %13 : vector<56x1xf32> to vector<56x126xf32>
    %16 = vector.broadcast %14 : vector<1x126xf32> to vector<56x126xf32>
    %17 = arith.mulf %15, %16 : vector<56x126xf32>
    %18 = arith.addf %12, %17 : vector<56x126xf32>
    %19 = vector.extract_strided_slice %1 {offsets = [0, 3], sizes = [56, 1], strides = [1, 1]} : vector<56x6xf32> to vector<56x1xf32>
    %20 = vector.extract_strided_slice %0 {offsets = [3, 0], sizes = [1, 126], strides = [1, 1]} : vector<8x126xf32> to vector<1x126xf32>
    %21 = vector.broadcast %19 : vector<56x1xf32> to vector<56x126xf32>
    %22 = vector.broadcast %20 : vector<1x126xf32> to vector<56x126xf32>
    %23 = arith.mulf %21, %22 : vector<56x126xf32>
    %24 = arith.addf %18, %23 : vector<56x126xf32>
    %25 = vector.extract_strided_slice %1 {offsets = [0, 4], sizes = [56, 1], strides = [1, 1]} : vector<56x6xf32> to vector<56x1xf32>
    %26 = vector.extract_strided_slice %0 {offsets = [4, 0], sizes = [1, 126], strides = [1, 1]} : vector<8x126xf32> to vector<1x126xf32>
    %27 = vector.broadcast %25 : vector<56x1xf32> to vector<56x126xf32>
    %28 = vector.broadcast %26 : vector<1x126xf32> to vector<56x126xf32>
    %29 = arith.mulf %27, %28 : vector<56x126xf32>
    %30 = arith.addf %24, %29 : vector<56x126xf32>
    %31 = vector.extract_strided_slice %1 {offsets = [0, 5], sizes = [56, 1], strides = [1, 1]} : vector<56x6xf32> to vector<56x1xf32>
    %32 = vector.extract_strided_slice %0 {offsets = [5, 0], sizes = [1, 126], strides = [1, 1]} : vector<8x126xf32> to vector<1x126xf32>
    %33 = vector.broadcast %31 : vector<56x1xf32> to vector<56x126xf32>
    %34 = vector.broadcast %32 : vector<1x126xf32> to vector<56x126xf32>
    %35 = arith.mulf %33, %34 : vector<56x126xf32>
    %36 = arith.addf %30, %35 : vector<56x126xf32>
    %37 = vector.extract_strided_slice %0 {offsets = [6, 0], sizes = [1, 126], strides = [1, 1]} : vector<8x126xf32> to vector<1x126xf32>
    %cst = arith.constant 5.000000e-01 : f32
    %38 = vector.broadcast %cst : f32 to vector<1x126xf32>
    %39 = arith.cmpf ogt, %37, %38 : vector<1x126xf32>
    %40 = vector.extract_strided_slice %0 {offsets = [7, 0], sizes = [1, 126], strides = [1, 1]} : vector<8x126xf32> to vector<1x126xf32>
    %cst_3 = arith.constant 5.000000e-01 : f32
    %41 = vector.broadcast %cst_3 : f32 to vector<1x126xf32>
    %42 = arith.cmpf ogt, %40, %41 : vector<1x126xf32>
    %43 = math.sin %36 : vector<56x126xf32>
    %44 = math.cos %36 : vector<56x126xf32>
    %45 = vector.shape_cast %39 : vector<1x126xi1> to vector<1x126xi1>
    %46 = vector.broadcast %45 : vector<1x126xi1> to vector<56x126xi1>
    %47 = arith.select %46, %43, %44 : vector<56x126xi1>, vector<56x126xf32>
    %48 = vector.shape_cast %42 : vector<1x126xi1> to vector<1x126xi1>
    %49 = vector.broadcast %48 : vector<1x126xi1> to vector<56x126xi1>
    %50 = arith.select %49, %36, %47 : vector<56x126xi1>, vector<56x126xf32>
    %c0_4 = arith.constant 0 : index
    %c0_5 = arith.constant 0 : index
    %51 = vector.load %arg3[%c0_4, %c0_5] : memref<56x126xf32, #tpu.memory_space<vmem>>, vector<56x126xf32>
    tpu.vector_store %arg3[%c0_4, %c0_5], %50 {strides = array<i32>} : memref<56x126xf32, #tpu.memory_space<vmem>>, vector<56x126xf32>,
    return
  }
  func.func @transform_0(%arg0: i32) -> (i32, i32) {
    %c0_i32 = arith.constant 0 : i32
    %c0_i32_0 = arith.constant 0 : i32
    %c0_i32_1 = arith.constant 0 : i32
    return %c0_i32, %c0_i32_0 : i32, i32
  }
  func.func @transform_1(%arg0: i32) -> (i32, i32) {
    %c0_i32 = arith.constant 0 : i32
    %c0_i32_0 = arith.constant 0 : i32
    return %arg0, %c0_i32 : i32, i32
  }
  func.func @transform_2(%arg0: i32) -> (i32, i32) {
    %c0_i32 = arith.constant 0 : i32
    %c0_i32_0 = arith.constant 0 : i32
    return %arg0, %c0_i32 : i32, i32
  }
}

</mosaic_0001>

<llo_original>
// kernel: tpu_custom_call.1
$region0: #{tpu_custom_call.1}
  #allocation0 [shape = 'u32[]', space=smem, size = 0x4, offset = 0x4, fixed_abs, tag = 'smem constant byte address 0x4 - core index']
  #allocation1 [shape = 'u32[72,128]{1,0:T(1,128)}', space=vmem, size = 0x9000, scoped, tag = 'internal scratch']
  %s0 = inlined_call_operand.vmem [shape: f32[8,126], index: 0, kind: input, shape index: {}]
  %s1 = inlined_call_operand.vmem [shape: f32[112,6], index: 1, kind: input, shape index: {}]
  %s2 = inlined_call_operand.hbm [shape: f32[112,126], index: 2, kind: output, shape index: {}]
  %s3 = sld [smem:[#allocation0]]
  $region41: #{tpu_custom_call.1} parent=0
    _
  %s5 = ssub.s32 1, %s3
  %s6 = scalar_select 0, %s5, %s3
  $region1: #{tpu_custom_call.1} parent=0
    #allocation2 [shape = 'u8[57344]{0}', space=vmem, size = 0xe000, scoped, tag = 'output window, operand 0']
    #allocation3 [shape = 's32[2]{0}', space=sflag, size = 0x8, scoped, tag = 'scoped memory for tpu_custom_call.1']
    %7 = vsyncpa [#allocation3], 0
    %s8 = scalar_lea.sflag [#allocation3], 1
    %9 = vsyncpa %s8, 0
    loop: start=0, step=1, limit=4
    $region2: #{tpu_custom_call.1} parent=1 // loop_pre_header
      _
    $region3: #{tpu_custom_call.1} parent=1 // loop_header
      %s11 = sphi 0, %s15
      %p12 = scmp.ge.s32.totalorder %s11, 4
      %s19 = sphi 0, %s19
      %s21 = sphi 0, %s19
      %s22 = sphi 0, %s21
      %s36 = sphi 0, %s22
      %s42 = sphi 0, %s44
      %s45 = sphi 0, %s42
      %s46 = sphi 0, %s45
      %s62 = sphi 0, %s46
      %s68 = sphi 0, %s70
      %s71 = sphi 0, %s68
      %s72 = sphi 0, %s71
      %s88 = sphi 0, %s72
    $region4: #{tpu_custom_call.1} parent=1 // loop_header_branch
      %14 = sbr.rel (%p12) target = $region8
    $region5: #{tpu_custom_call.1} parent=1 // loop_body
      %s16 = ssub.s32 %s11, 1
      %s17 = ssub.s32 %s11, 2
      %s18 = sadd.s32 %s11, 1
      %s20 = sadd.s32 %s19, 1
      %p23 = scmp.eq.s32.totalorder %s11, 1
      %p24 = scmp.ne.s32.totalorder %s19, %s21
      %p25 = scmp.eq.s32.totalorder %s11, 0
      %p26 = por %p24, %p25
      %p27 = scmp.ne.s32.totalorder %s19, %s21
      %p28 = scmp.eq.s32.totalorder %s16, 1
      %p29 = por %p27, %p28
      %p30 = scmp.ne.s32.totalorder %s21, %s22
      %p31 = scmp.eq.s32.totalorder %s16, 0
      %p32 = por %p30, %p31
      %p33 = scmp.ne.s32.totalorder %s21, %s22
      %p34 = scmp.eq.s32.totalorder %s17, 1
      %p35 = por %p33, %p34
      %p37 = scmp.ne.s32.totalorder %s22, %s36
      %p38 = scmp.eq.s32.totalorder %s17, 0
      %p39 = por %p37, %p38
      %s40 = ssub.s32 %s11, %s18
      %p41 = scmp.eq.s32.totalorder %s40, 0
      %s43 = sadd.s32 %s42, 1
      %s44 = scalar_select %p41, %s42, %s43
      %p47 = pneg %p41
      %p48 = scmp.eq.s32.totalorder %s11, 1
      %p49 = por %p47, %p48
      %p50 = scmp.ne.s32.totalorder %s42, %s45
      %p51 = scmp.eq.s32.totalorder %s11, 0
      %p52 = por %p50, %p51
      %p53 = scmp.ne.s32.totalorder %s42, %s45
      %p54 = scmp.eq.s32.totalorder %s16, 1
      %p55 = por %p53, %p54
      %p56 = scmp.ne.s32.totalorder %s45, %s46
      %p57 = scmp.eq.s32.totalorder %s16, 0
      %p58 = por %p56, %p57
      %p59 = scmp.ne.s32.totalorder %s45, %s46
      %p60 = scmp.eq.s32.totalorder %s17, 1
      %p61 = por %p59, %p60
      %p63 = scmp.ne.s32.totalorder %s46, %s62
      %p64 = scmp.eq.s32.totalorder %s17, 0
      %p65 = por %p63, %p64
      %s66 = ssub.s32 %s11, %s18
      %p67 = scmp.eq.s32.totalorder %s66, 0
      %s69 = sadd.s32 %s68, 1
      %s70 = scalar_select %p67, %s68, %s69
      %p73 = pneg %p67
      %p74 = scmp.eq.s32.totalorder %s11, 1
      %p75 = por %p73, %p74
      %p76 = scmp.ne.s32.totalorder %s68, %s71
      %p77 = scmp.eq.s32.totalorder %s11, 0
      %p78 = por %p76, %p77
      %p79 = scmp.ne.s32.totalorder %s68, %s71
      %p80 = scmp.eq.s32.totalorder %s16, 1
      %p81 = por %p79, %p80
      %p82 = scmp.ne.s32.totalorder %s71, %s72
      %p83 = scmp.eq.s32.totalorder %s16, 0
      %p84 = por %p82, %p83
      %p85 = scmp.ne.s32.totalorder %s71, %s72
      %p86 = scmp.eq.s32.totalorder %s17, 1
      %p87 = por %p85, %p86
      %p89 = scmp.ne.s32.totalorder %s72, %s88
      %p90 = scmp.eq.s32.totalorder %s17, 0
      %p91 = por %p89, %p90
      %p92 = scmp.le.s32.totalorder 1, %s11
      %p93 = scmp.lt.s32.totalorder %s11, 3
      %p94 = pnand %p92, %p93
      %p95 = pneg %p94
      // Predicated region
      $region9: #{tpu_custom_call.1} parent=5 // pred_check
        _
      $region10: #{tpu_custom_call.1} parent=5 // pred_check_branch
        %97 = sbr.rel (%p94) target = $region12
      $region11: #{tpu_custom_call.1} parent=5 // pred_region
        %s98 = ssub.s32 %s11, 1
        // Predicated region
        $region13: #{tpu_custom_call.1} parent=11 // pred_check
          %p99 = pneg %p32
        $region14: #{tpu_custom_call.1} parent=11 // pred_check_branch
          %101 = sbr.rel (%p99) target = $region16
        $region15: #{tpu_custom_call.1} parent=11 // pred_region
          _
        $region16: #{tpu_custom_call.1} parent=11 // pred_fallthru
          _
      $region12: #{tpu_custom_call.1} parent=5 // pred_fallthru
        _
      %p102 = scmp.lt.s32.totalorder %s11, 2
      // Predicated region
      $region17: #{tpu_custom_call.1} parent=5 // pred_check
        %p103 = pneg %p102
      $region18: #{tpu_custom_call.1} parent=5 // pred_check_branch
        %105 = sbr.rel (%p103) target = $region20
      $region19: #{tpu_custom_call.1} parent=5 // pred_region
        // Predicated region
        $region21: #{tpu_custom_call.1} parent=19 // pred_check
          %p106 = pneg %p52
        $region22: #{tpu_custom_call.1} parent=19 // pred_check_branch
          %108 = sbr.rel (%p106) target = $region24
        $region23: #{tpu_custom_call.1} parent=19 // pred_region
          %s109 = smul.u32 7, %s11
          %p110 = scmp.lt.s32.totalorder %s109, 13
          %s111 = scalar_select %p110, %s109, 13
          %s112 = smul.addr %s111, 8
          %s113 = scalar_lea.vmem %s1, %s112
          %s114 = smul.u32 7, %s11
        $region24: #{tpu_custom_call.1} parent=19 // pred_fallthru
          _
      $region20: #{tpu_custom_call.1} parent=5 // pred_fallthru
        _
      %p115 = scmp.le.s32.totalorder 1, %s11
      %p116 = scmp.lt.s32.totalorder %s11, 3
      %p117 = pnand %p115, %p116
      %p118 = pneg %p117
      // Predicated region
      $region25: #{tpu_custom_call.1} parent=5 // pred_check
        _
      $region26: #{tpu_custom_call.1} parent=5 // pred_check_branch
        %120 = sbr.rel (%p117) target = $region28
      $region27: #{tpu_custom_call.1} parent=5 // pred_region
        %s121 = ssub.s32 %s11, 1
        %p122 = pneg %p32
        %p123 = pneg %p29
        %s124 = smul.u32 7, %s16
        %p125 = scmp.lt.s32.totalorder %s124, 13
        %s126 = scalar_select %p125, %s124, 13
        %s127 = smul.addr %s126, 8
        %s128 = scalar_lea.vmem %s1, %s127
        %p129 = pneg %p58
        %p130 = pneg %p55
        %p131 = pneg %p84
        %p132 = pneg %p81
        %s133 = sand.u32 %s71, 1
        %s134 = scalar_lea.sflag [#allocation3], %s133
        %s135 = sand.u32 %s71, 1
        %s136 = smul.addr %s135, 56
        %s137 = scalar_lea.vmem [#allocation2], %s136
        %s138 = smul.u32 7, %s16
        %p139 = scmp.lt.s32.totalorder %s138, 13
        %s140 = scalar_select %p139, %s138, 13
        %s141 = smul.addr %s140, 8
        %s142 = scalar_lea.vmem %s1, %s141
        %s143 = smul.u32 7, %s16
        %s144 = smul.u32 7, %s16
        %v145 = vld [vmem:[%s0] sm:$0xff]
        %v146 = vld [vmem:[%s142] sm:$0xff]
        %v147 = vld [vmem:[%s142 + $0x8] sm:$0xff]
        %v148 = vld [vmem:[%s142 + $0x10] sm:$0xff]
        %v149 = vld [vmem:[%s142 + $0x18] sm:$0xff]
        %v150 = vld [vmem:[%s142 + $0x20] sm:$0xff]
        %v151 = vld [vmem:[%s142 + $0x28] sm:$0xff]
        %v152 = vld [vmem:[%s142 + $0x30] sm:$0xff]
        %154 = vset.pattern.permute.xlu0 0
        %155 = vperm.xlu0 %154, %v146
        %v156 = vpop.permute.xlu0 %155
        %159 = vset.pattern.permute.xlu0 0
        %160 = vperm.xlu0 %159, %v147
        %v161 = vpop.permute.xlu0 %160
        %164 = vset.pattern.permute.xlu0 0
        %165 = vperm.xlu0 %164, %v148
        %v166 = vpop.permute.xlu0 %165
        %169 = vset.pattern.permute.xlu0 0
        %170 = vperm.xlu0 %169, %v149
        %v171 = vpop.permute.xlu0 %170
        %174 = vset.pattern.permute.xlu0 0
        %175 = vperm.xlu0 %174, %v150
        %v176 = vpop.permute.xlu0 %175
        %179 = vset.pattern.permute.xlu0 0
        %180 = vperm.xlu0 %179, %v151
        %v181 = vpop.permute.xlu0 %180
        %184 = vset.pattern.permute.xlu0 0
        %185 = vperm.xlu0 %184, %v152
        %v186 = vpop.permute.xlu0 %185
        %v188 = vperm.slane %v145, 0
        %v189 = vmul.f32 %v156, %v188
        %v190 = vmul.f32 %v161, %v188
        %v191 = vmul.f32 %v166, %v188
        %v192 = vmul.f32 %v171, %v188
        %v193 = vmul.f32 %v176, %v188
        %v194 = vmul.f32 %v181, %v188
        %v195 = vmul.f32 %v186, %v188
        %196 = vset.pattern.permute.xlu0 1
        %197 = vperm.xlu0 %196, %v146
        %v198 = vpop.permute.xlu0 %197
        %200 = vset.pattern.permute.xlu0 1
        %201 = vperm.xlu0 %200, %v147
        %v202 = vpop.permute.xlu0 %201
        %204 = vset.pattern.permute.xlu0 1
        %205 = vperm.xlu0 %204, %v148
        %v206 = vpop.permute.xlu0 %205
        %208 = vset.pattern.permute.xlu0 1
        %209 = vperm.xlu0 %208, %v149
        %v210 = vpop.permute.xlu0 %209
        %212 = vset.pattern.permute.xlu0 1
        %213 = vperm.xlu0 %212, %v150
        %v214 = vpop.permute.xlu0 %213
        %216 = vset.pattern.permute.xlu0 1
        %217 = vperm.xlu0 %216, %v151
        %v218 = vpop.permute.xlu0 %217
        %220 = vset.pattern.permute.xlu0 1
        %221 = vperm.xlu0 %220, %v152
        %v222 = vpop.permute.xlu0 %221
        %v224 = vperm.slane %v145, 1
        %v225 = vmul.f32 %v198, %v224
        %v226 = vmul.f32 %v202, %v224
        %v227 = vmul.f32 %v206, %v224
        %v228 = vmul.f32 %v210, %v224
        %v229 = vmul.f32 %v214, %v224
        %v230 = vmul.f32 %v218, %v224
        %v231 = vmul.f32 %v222, %v224
        %v232 = vadd.f32 %v189, %v225
        %v233 = vadd.f32 %v190, %v226
        %v234 = vadd.f32 %v191, %v227
        %v235 = vadd.f32 %v192, %v228
        %v236 = vadd.f32 %v193, %v229
        %v237 = vadd.f32 %v194, %v230
        %v238 = vadd.f32 %v195, %v231
        %239 = vset.pattern.permute.xlu0 2
        %240 = vperm.xlu0 %239, %v146
        %v241 = vpop.permute.xlu0 %240
        %243 = vset.pattern.permute.xlu0 2
        %244 = vperm.xlu0 %243, %v147
        %v245 = vpop.permute.xlu0 %244
        %247 = vset.pattern.permute.xlu0 2
        %248 = vperm.xlu0 %247, %v148
        %v249 = vpop.permute.xlu0 %248
        %251 = vset.pattern.permute.xlu0 2
        %252 = vperm.xlu0 %251, %v149
        %v253 = vpop.permute.xlu0 %252
        %255 = vset.pattern.permute.xlu0 2
        %256 = vperm.xlu0 %255, %v150
        %v257 = vpop.permute.xlu0 %256
        %259 = vset.pattern.permute.xlu0 2
        %260 = vperm.xlu0 %259, %v151
        %v261 = vpop.permute.xlu0 %260
        %263 = vset.pattern.permute.xlu0 2
        %264 = vperm.xlu0 %263, %v152
        %v265 = vpop.permute.xlu0 %264
        %v267 = vperm.slane %v145, 2
        %v268 = vmul.f32 %v241, %v267
        %v269 = vmul.f32 %v245, %v267
        %v270 = vmul.f32 %v249, %v267
        %v271 = vmul.f32 %v253, %v267
        %v272 = vmul.f32 %v257, %v267
        %v273 = vmul.f32 %v261, %v267
        %v274 = vmul.f32 %v265, %v267
        %v275 = vadd.f32 %v232, %v268
        %v276 = vadd.f32 %v233, %v269
        %v277 = vadd.f32 %v234, %v270
        %v278 = vadd.f32 %v235, %v271
        %v279 = vadd.f32 %v236, %v272
        %v280 = vadd.f32 %v237, %v273
        %v281 = vadd.f32 %v238, %v274
        %282 = vset.pattern.permute.xlu0 3
        %283 = vperm.xlu0 %282, %v146
        %v284 = vpop.permute.xlu0 %283
        %286 = vset.pattern.permute.xlu0 3
        %287 = vperm.xlu0 %286, %v147
        %v288 = vpop.permute.xlu0 %287
        %290 = vset.pattern.permute.xlu0 3
        %291 = vperm.xlu0 %290, %v148
        %v292 = vpop.permute.xlu0 %291
        %294 = vset.pattern.permute.xlu0 3
        %295 = vperm.xlu0 %294, %v149
        %v296 = vpop.permute.xlu0 %295
        %298 = vset.pattern.permute.xlu0 3
        %299 = vperm.xlu0 %298, %v150
        %v300 = vpop.permute.xlu0 %299
        %302 = vset.pattern.permute.xlu0 3
        %303 = vperm.xlu0 %302, %v151
        %v304 = vpop.permute.xlu0 %303
        %306 = vset.pattern.permute.xlu0 3
        %307 = vperm.xlu0 %306, %v152
        %v308 = vpop.permute.xlu0 %307
        %v310 = vperm.slane %v145, 3
        %v311 = vmul.f32 %v284, %v310
        %v312 = vmul.f32 %v288, %v310
        %v313 = vmul.f32 %v292, %v310
        %v314 = vmul.f32 %v296, %v310
        %v315 = vmul.f32 %v300, %v310
        %v316 = vmul.f32 %v304, %v310
        %v317 = vmul.f32 %v308, %v310
        %v318 = vadd.f32 %v275, %v311
        %v319 = vadd.f32 %v276, %v312
        %v320 = vadd.f32 %v277, %v313
        %v321 = vadd.f32 %v278, %v314
        %v322 = vadd.f32 %v279, %v315
        %v323 = vadd.f32 %v280, %v316
        %v324 = vadd.f32 %v281, %v317
        %325 = vset.pattern.permute.xlu0 4
        %326 = vperm.xlu0 %325, %v146
        %v327 = vpop.permute.xlu0 %326
        %329 = vset.pattern.permute.xlu0 4
        %330 = vperm.xlu0 %329, %v147
        %v331 = vpop.permute.xlu0 %330
        %333 = vset.pattern.permute.xlu0 4
        %334 = vperm.xlu0 %333, %v148
        %v335 = vpop.permute.xlu0 %334
        %337 = vset.pattern.permute.xlu0 4
        %338 = vperm.xlu0 %337, %v149
        %v339 = vpop.permute.xlu0 %338
        %341 = vset.pattern.permute.xlu0 4
        %342 = vperm.xlu0 %341, %v150
        %v343 = vpop.permute.xlu0 %342
        %345 = vset.pattern.permute.xlu0 4
        %346 = vperm.xlu0 %345, %v151
        %v347 = vpop.permute.xlu0 %346
        %349 = vset.pattern.permute.xlu0 4
        %350 = vperm.xlu0 %349, %v152
        %v351 = vpop.permute.xlu0 %350
        %v353 = vperm.slane %v145, 4
        %v354 = vmul.f32 %v327, %v353
        %v355 = vmul.f32 %v331, %v353
        %v356 = vmul.f32 %v335, %v353
        %v357 = vmul.f32 %v339, %v353
        %v358 = vmul.f32 %v343, %v353
        %v359 = vmul.f32 %v347, %v353
        %v360 = vmul.f32 %v351, %v353
        %v361 = vadd.f32 %v318, %v354
        %v362 = vadd.f32 %v319, %v355
        %v363 = vadd.f32 %v320, %v356
        %v364 = vadd.f32 %v321, %v357
        %v365 = vadd.f32 %v322, %v358
        %v366 = vadd.f32 %v323, %v359
        %v367 = vadd.f32 %v324, %v360
        %368 = vset.pattern.permute.xlu0 5
        %369 = vperm.xlu0 %368, %v146
        %v370 = vpop.permute.xlu0 %369
        %372 = vset.pattern.permute.xlu0 5
        %373 = vperm.xlu0 %372, %v147
        %v374 = vpop.permute.xlu0 %373
        %376 = vset.pattern.permute.xlu0 5
        %377 = vperm.xlu0 %376, %v148
        %v378 = vpop.permute.xlu0 %377
        %380 = vset.pattern.permute.xlu0 5
        %381 = vperm.xlu0 %380, %v149
        %v382 = vpop.permute.xlu0 %381
        %384 = vset.pattern.permute.xlu0 5
        %385 = vperm.xlu0 %384, %v150
        %v386 = vpop.permute.xlu0 %385
        %388 = vset.pattern.permute.xlu0 5
        %389 = vperm.xlu0 %388, %v151
        %v390 = vpop.permute.xlu0 %389
        %392 = vset.pattern.permute.xlu0 5
        %393 = vperm.xlu0 %392, %v152
        %v394 = vpop.permute.xlu0 %393
        %v396 = vperm.slane %v145, 5
        %v397 = vmul.f32 %v370, %v396
        %v398 = vmul.f32 %v374, %v396
        %v399 = vmul.f32 %v378, %v396
        %v400 = vmul.f32 %v382, %v396
        %v401 = vmul.f32 %v386, %v396
        %v402 = vmul.f32 %v390, %v396
        %v403 = vmul.f32 %v394, %v396
        %v404 = vadd.f32 %v361, %v397
        %v405 = vadd.f32 %v362, %v398
        %v406 = vadd.f32 %v363, %v399
        %v407 = vadd.f32 %v364, %v400
        %v408 = vadd.f32 %v365, %v401
        %v409 = vadd.f32 %v366, %v402
        %v410 = vadd.f32 %v367, %v403
        %vm411 = vcmp.gt.f32.partialorder %v145, 0.5
        %v412 = vand.u32 2147483647, %v404
        %vm413 = vcmp.le.f32.partialorder %v412, 0.7853982
        %vm414 = vcmp.lt.s32.totalorder %v404, 0
        %v415 = vand.u32 %v404, 2139095040
        %v416 = vshrl.u32 %v415, 23
        %v417 = vsub.s32 %v416, 127
        %v418 = vand.u32 2147483647, %v404
        %v419 = vand.u32 %v418, 8388607
        %v420 = vor.u32 %v419, 8388608
        %v421 = vsub.s32 0, %v420
        %v422 = vadd.s32 %v417, 1
        %vm423 = vcmp.gt.s32.totalorder %v422, 0
        %v424 = vsel %vm423, %v422, 0
        %v425 = vshrl.u32 %v424, 5
        %v426 = vand.u32 %v424, 31
        %v427 = vsub.s32 32, %v426
        %v428 = vshrl.u32 683565275, %v427
        %v429 = vshll.u32 683565275, %v426
        %v430 = vshrl.u32 2475754826, %v427
        %v431 = vor.u32 %v429, %v430
        %v432 = vshll.u32 2475754826, %v426
        %v433 = vshrl.u32 2131351028, %v427
        %v434 = vor.u32 %v432, %v433
        %v435 = vshll.u32 2131351028, %v426
        %v436 = vshrl.u32 2102212464, %v427
        %v437 = vor.u32 %v435, %v436
        %v438 = vshll.u32 2102212464, %v426
        %v439 = vshrl.u32 920167782, %v427
        %v440 = vor.u32 %v438, %v439
        %v441 = vshll.u32 920167782, %v426
        %v442 = vshrl.u32 1326507024, %v427
        %v443 = vor.u32 %v441, %v442
        %vm444 = vcmp.lt.s32.totalorder %v425, 1
        %vm445 = vcmp.lt.s32.totalorder %v425, 2
        %vm446 = vcmp.lt.s32.totalorder %v425, 3
        %vm447 = vcmp.lt.s32.totalorder %v425, 4
        %v448 = vsel %vm444, %v428, %v431
        %v449 = vsel %vm447, %v437, 2102212464
        %v450 = vsel %vm446, %v434, %v449
        %v451 = vsel %vm445, %v448, %v450
        %v452 = vsel %vm444, %v431, %v434
        %v453 = vsel %vm447, %v440, 920167782
        %v454 = vsel %vm446, %v437, %v453
        %v455 = vsel %vm445, %v452, %v454
        %v456 = vsel %vm444, %v434, %v437
        %v457 = vsel %vm447, %v443, 1326507024
        %v458 = vsel %vm446, %v440, %v457
        %v459 = vsel %vm445, %v456, %v458
        %v460 = vshll.u32 %v420, 8
        %v461 = vand.u32 %v460, 65535
        %v462 = vshrl.u32 %v460, 16
        %v463 = vand.u32 %v459, 65535
        %v464 = vshrl.u32 %v459, 16
        %v465 = vmul.u32 %v461, %v463
        %v466 = vmul.u32 %v461, %v464
        %v467 = vmul.u32 %v462, %v463
        %v468 = vmul.u32 %v462, %v464
        %v469 = vshll.u32 %v466, 16
        %v470 = vshrl.u32 %v466, 16
        %v471 = vshll.u32 %v467, 16
        %v472 = vshrl.u32 %v467, 16
        %vm473 = vc.u32 %v465, %v469
        %v474 = vsel %vm473, 1, 0
        %v475 = vadd.s32 %v465, %v469
        %v476 = vadd.s32 %v468, %v474
        %vm477 = vc.u32 %v475, %v471
        %v478 = vsel %vm477, 1, 0
        %v479 = vadd.s32 %v475, %v471
        %v480 = vadd.s32 %v476, %v478
        %v481 = vadd.s32 %v480, %v470
        %v482 = vadd.s32 %v481, %v472
        %v483 = vand.u32 %v460, 65535
        %v484 = vshrl.u32 %v460, 16
        %v485 = vand.u32 %v455, 65535
        %v486 = vshrl.u32 %v455, 16
        %v487 = vmul.u32 %v483, %v485
        %v488 = vmul.u32 %v483, %v486
        %v489 = vmul.u32 %v484, %v485
        %v490 = vmul.u32 %v484, %v486
        %v491 = vshll.u32 %v488, 16
        %v492 = vshrl.u32 %v488, 16
        %v493 = vshll.u32 %v489, 16
        %v494 = vshrl.u32 %v489, 16
        %vm495 = vc.u32 %v487, %v491
        %v496 = vsel %vm495, 1, 0
        %v497 = vadd.s32 %v487, %v491
        %v498 = vadd.s32 %v490, %v496
        %vm499 = vc.u32 %v497, %v493
        %v500 = vsel %vm499, 1, 0
        %v501 = vadd.s32 %v497, %v493
        %v502 = vadd.s32 %v498, %v500
        %v503 = vadd.s32 %v502, %v492
        %v504 = vadd.s32 %v503, %v494
        %v505 = vmul.u32 %v460, %v451
        %v506 = vadd.s32 %v482, %v501
        %vm507 = vc.u32 %v482, %v501
        %v508 = vadd.s32 %v504, 1
        %v509 = vsel %vm507, %v508, %v504
        %v510 = vadd.s32 %v505, %v509
        %v511 = vadd.s32 %v510, 536870912
        %v512 = vshrl.u32 %v511, 30
        %v513 = vshll.u32 %v512, 30
        %v514 = vsub.s32 %v510, %v513
        %vm515 = vcmp.lt.s32.totalorder %v514, 0
        %v516 = vsub.s32 0, %v514
        %v517 = vsel %vm515, %v516, %v514
        %v518 = vclz %v517
        %v519 = vsub.s32 %v518, 2
        %vm520 = vcmp.gt.s32.totalorder 0, %v519
        %v521 = vsel %vm520, 0, %v519
        %v522 = vsub.s32 32, %v521
        %v523 = vshll.u32 %v514, %v521
        %v524 = vshrl.u32 %v506, %v522
        %v525 = vor.u32 %v523, %v524
        %v526 = vsub.s32 4294967266, %v521
        %v527 = vadd.s32 %v526, 127
        %v528 = vshll.u32 %v527, 23
        %v529 = vor.u32 4788187, %v528
        %v530 = vand.u32 2147483647, %v529
        %v532 = vcvt.s32.f32 %v525
        %v533 = vmul.f32 %v532, %v530
        %v534 = vxor.u32 %v533, 2147483648
        %v535 = vsel %vm414, %v534, %v533
        %v536 = vsub.s32 4, %v512
        %v537 = vsel %vm414, %v536, %v512
        %v538 = vsel %vm413, %v404, %v535
        %v539 = vsel %vm413, 0, %v537
        %v540 = vmul.f32 %v538, %v538
        %v541 = vmul.f32 %v540, -0.001358992
        %v542 = vadd.f32 %v541, 0.041655596
        %v543 = vmul.f32 %v540, %v542
        %v544 = vadd.f32 %v543, -0.4999988
        %v545 = vmul.f32 %v540, %v544
        %v546 = vadd.f32 1.0, %v545
        %v547 = vmul.f32 %v538, %v538
        %v548 = vmul.f32 %v547, -0.00019511016
        %v549 = vadd.f32 %v548, 0.008332121
        %v550 = vmul.f32 %v547, %v549
        %v551 = vadd.f32 %v550, -0.16666654
        %v552 = vmul.f32 %v547, %v551
        %v553 = vadd.f32 %v552, 1.0
        %v554 = vmul.f32 %v553, %v538
        %vm555 = vweird.f32 %v404
        %v556 = vadd.s32 %v539, 3
        %v557 = vand.u32 %v556, 3
        %vm558 = vcmp.lt.s32.totalorder %v557, 2
        %vm559 = vcmp.eq.s32.totalorder %v557, 0
        %v560 = vxor.u32 %v554, 2147483648
        %v561 = vsel %vm559, %v546, %v560
        %vm562 = vcmp.eq.s32.totalorder %v557, 2
        %v563 = vxor.u32 %v546, 2147483648
        %v564 = vsel %vm562, %v563, %v554
        %v565 = vsel %vm558, %v561, %v564
        %v566 = vsel %vm555, nan, %v565
        %v567 = vand.u32 2147483647, %v405
        %vm568 = vcmp.le.f32.partialorder %v567, 0.7853982
        %vm569 = vcmp.lt.s32.totalorder %v405, 0
        %v570 = vand.u32 %v405, 2139095040
        %v571 = vshrl.u32 %v570, 23
        %v572 = vsub.s32 %v571, 127
        %v573 = vand.u32 2147483647, %v405
        %v574 = vand.u32 %v573, 8388607
        %v575 = vor.u32 %v574, 8388608
        %v576 = vsub.s32 0, %v575
        %v577 = vadd.s32 %v572, 1
        %vm578 = vcmp.gt.s32.totalorder %v577, 0
        %v579 = vsel %vm578, %v577, 0
        %v580 = vshrl.u32 %v579, 5
        %v581 = vand.u32 %v579, 31
        %v582 = vsub.s32 32, %v581
        %v583 = vshrl.u32 683565275, %v582
        %v584 = vshll.u32 683565275, %v581
        %v585 = vshrl.u32 2475754826, %v582
        %v586 = vor.u32 %v584, %v585
        %v587 = vshll.u32 2475754826, %v581
        %v588 = vshrl.u32 2131351028, %v582
        %v589 = vor.u32 %v587, %v588
        %v590 = vshll.u32 2131351028, %v581
        %v591 = vshrl.u32 2102212464, %v582
        %v592 = vor.u32 %v590, %v591
        %v593 = vshll.u32 2102212464, %v581
        %v594 = vshrl.u32 920167782, %v582
        %v595 = vor.u32 %v593, %v594
        %v596 = vshll.u32 920167782, %v581
        %v597 = vshrl.u32 1326507024, %v582
        %v598 = vor.u32 %v596, %v597
        %vm599 = vcmp.lt.s32.totalorder %v580, 1
        %vm600 = vcmp.lt.s32.totalorder %v580, 2
        %vm601 = vcmp.lt.s32.totalorder %v580, 3
        %vm602 = vcmp.lt.s32.totalorder %v580, 4
        %v603 = vsel %vm599, %v583, %v586
        %v604 = vsel %vm602, %v592, 2102212464
        %v605 = vsel %vm601, %v589, %v604
        %v606 = vsel %vm600, %v603, %v605
        %v607 = vsel %vm599, %v586, %v589
        %v608 = vsel %vm602, %v595, 920167782
        %v609 = vsel %vm601, %v592, %v608
        %v610 = vsel %vm600, %v607, %v609
        %v611 = vsel %vm599, %v589, %v592
        %v612 = vsel %vm602, %v598, 1326507024
        %v613 = vsel %vm601, %v595, %v612
        %v614 = vsel %vm600, %v611, %v613
        %v615 = vshll.u32 %v575, 8
        %v616 = vand.u32 %v615, 65535
        %v617 = vshrl.u32 %v615, 16
        %v618 = vand.u32 %v614, 65535
        %v619 = vshrl.u32 %v614, 16
        %v620 = vmul.u32 %v616, %v618
        %v621 = vmul.u32 %v616, %v619
        %v622 = vmul.u32 %v617, %v618
        %v623 = vmul.u32 %v617, %v619
        %v624 = vshll.u32 %v621, 16
        %v625 = vshrl.u32 %v621, 16
        %v626 = vshll.u32 %v622, 16
        %v627 = vshrl.u32 %v622, 16
        %vm628 = vc.u32 %v620, %v624
        %v629 = vsel %vm628, 1, 0
        %v630 = vadd.s32 %v620, %v624
        %v631 = vadd.s32 %v623, %v629
        %vm632 = vc.u32 %v630, %v626
        %v633 = vsel %vm632, 1, 0
        %v634 = vadd.s32 %v630, %v626
        %v635 = vadd.s32 %v631, %v633
        %v636 = vadd.s32 %v635, %v625
        %v637 = vadd.s32 %v636, %v627
        %v638 = vand.u32 %v615, 65535
        %v639 = vshrl.u32 %v615, 16
        %v640 = vand.u32 %v610, 65535
        %v641 = vshrl.u32 %v610, 16
        %v642 = vmul.u32 %v638, %v640
        %v643 = vmul.u32 %v638, %v641
        %v644 = vmul.u32 %v639, %v640
        %v645 = vmul.u32 %v639, %v641
        %v646 = vshll.u32 %v643, 16
        %v647 = vshrl.u32 %v643, 16
        %v648 = vshll.u32 %v644, 16
        %v649 = vshrl.u32 %v644, 16
        %vm650 = vc.u32 %v642, %v646
        %v651 = vsel %vm650, 1, 0
        %v652 = vadd.s32 %v642, %v646
        %v653 = vadd.s32 %v645, %v651
        %vm654 = vc.u32 %v652, %v648
        %v655 = vsel %vm654, 1, 0
        %v656 = vadd.s32 %v652, %v648
        %v657 = vadd.s32 %v653, %v655
        %v658 = vadd.s32 %v657, %v647
        %v659 = vadd.s32 %v658, %v649
        %v660 = vmul.u32 %v615, %v606
        %v661 = vadd.s32 %v637, %v656
        %vm662 = vc.u32 %v637, %v656
        %v663 = vadd.s32 %v659, 1
        %v664 = vsel %vm662, %v663, %v659
        %v665 = vadd.s32 %v660, %v664
        %v666 = vadd.s32 %v665, 536870912
        %v667 = vshrl.u32 %v666, 30
        %v668 = vshll.u32 %v667, 30
        %v669 = vsub.s32 %v665, %v668
        %vm670 = vcmp.lt.s32.totalorder %v669, 0
        %v671 = vsub.s32 0, %v669
        %v672 = vsel %vm670, %v671, %v669
        %v673 = vclz %v672
        %v674 = vsub.s32 %v673, 2
        %vm675 = vcmp.gt.s32.totalorder 0, %v674
        %v676 = vsel %vm675, 0, %v674
        %v677 = vsub.s32 32, %v676
        %v678 = vshll.u32 %v669, %v676
        %v679 = vshrl.u32 %v661, %v677
        %v680 = vor.u32 %v678, %v679
        %v681 = vsub.s32 4294967266, %v676
        %v682 = vadd.s32 %v681, 127
        %v683 = vshll.u32 %v682, 23
        %v684 = vor.u32 4788187, %v683
        %v685 = vand.u32 2147483647, %v684
        %v687 = vcvt.s32.f32 %v680
        %v688 = vmul.f32 %v687, %v685
        %v689 = vxor.u32 %v688, 2147483648
        %v690 = vsel %vm569, %v689, %v688
        %v691 = vsub.s32 4, %v667
        %v692 = vsel %vm569, %v691, %v667
        %v693 = vsel %vm568, %v405, %v690
        %v694 = vsel %vm568, 0, %v692
        %v695 = vmul.f32 %v693, %v693
        %v696 = vmul.f32 %v695, -0.001358992
        %v697 = vadd.f32 %v696, 0.041655596
        %v698 = vmul.f32 %v695, %v697
        %v699 = vadd.f32 %v698, -0.4999988
        %v700 = vmul.f32 %v695, %v699
        %v701 = vadd.f32 1.0, %v700
        %v702 = vmul.f32 %v693, %v693
        %v703 = vmul.f32 %v702, -0.00019511016
        %v704 = vadd.f32 %v703, 0.008332121
        %v705 = vmul.f32 %v702, %v704
        %v706 = vadd.f32 %v705, -0.16666654
        %v707 = vmul.f32 %v702, %v706
        %v708 = vadd.f32 %v707, 1.0
        %v709 = vmul.f32 %v708, %v693
        %vm710 = vweird.f32 %v405
        %v711 = vadd.s32 %v694, 3
        %v712 = vand.u32 %v711, 3
        %vm713 = vcmp.lt.s32.totalorder %v712, 2
        %vm714 = vcmp.eq.s32.totalorder %v712, 0
        %v715 = vxor.u32 %v709, 2147483648
        %v716 = vsel %vm714, %v701, %v715
        %vm717 = vcmp.eq.s32.totalorder %v712, 2
        %v718 = vxor.u32 %v701, 2147483648
        %v719 = vsel %vm717, %v718, %v709
        %v720 = vsel %vm713, %v716, %v719
        %v721 = vsel %vm710, nan, %v720
        %v722 = vand.u32 2147483647, %v406
        %vm723 = vcmp.le.f32.partialorder %v722, 0.7853982
        %vm724 = vcmp.lt.s32.totalorder %v406, 0
        %v725 = vand.u32 %v406, 2139095040
        %v726 = vshrl.u32 %v725, 23
        %v727 = vsub.s32 %v726, 127
        %v728 = vand.u32 2147483647, %v406
        %v729 = vand.u32 %v728, 8388607
        %v730 = vor.u32 %v729, 8388608
        %v731 = vsub.s32 0, %v730
        %v732 = vadd.s32 %v727, 1
        %vm733 = vcmp.gt.s32.totalorder %v732, 0
        %v734 = vsel %vm733, %v732, 0
        %v735 = vshrl.u32 %v734, 5
        %v736 = vand.u32 %v734, 31
        %v737 = vsub.s32 32, %v736
        %v738 = vshrl.u32 683565275, %v737
        %v739 = vshll.u32 683565275, %v736
        %v740 = vshrl.u32 2475754826, %v737
        %v741 = vor.u32 %v739, %v740
        %v742 = vshll.u32 2475754826, %v736
        %v743 = vshrl.u32 2131351028, %v737
        %v744 = vor.u32 %v742, %v743
        %v745 = vshll.u32 2131351028, %v736
        %v746 = vshrl.u32 2102212464, %v737
        %v747 = vor.u32 %v745, %v746
        %v748 = vshll.u32 2102212464, %v736
        %v749 = vshrl.u32 920167782, %v737
        %v750 = vor.u32 %v748, %v749
        %v751 = vshll.u32 920167782, %v736
        %v752 = vshrl.u32 1326507024, %v737
        %v753 = vor.u32 %v751, %v752
        %vm754 = vcmp.lt.s32.totalorder %v735, 1
        %vm755 = vcmp.lt.s32.totalorder %v735, 2
        %vm756 = vcmp.lt.s32.totalorder %v735, 3
        %vm757 = vcmp.lt.s32.totalorder %v735, 4
        %v758 = vsel %vm754, %v738, %v741
        %v759 = vsel %vm757, %v747, 2102212464
        %v760 = vsel %vm756, %v744, %v759
        %v761 = vsel %vm755, %v758, %v760
        %v762 = vsel %vm754, %v741, %v744
        %v763 = vsel %vm757, %v750, 920167782
        %v764 = vsel %vm756, %v747, %v763
        %v765 = vsel %vm755, %v762, %v764
        %v766 = vsel %vm754, %v744, %v747
        %v767 = vsel %vm757, %v753, 1326507024
        %v768 = vsel %vm756, %v750, %v767
        %v769 = vsel %vm755, %v766, %v768
        %v770 = vshll.u32 %v730, 8
        %v771 = vand.u32 %v770, 65535
        %v772 = vshrl.u32 %v770, 16
        %v773 = vand.u32 %v769, 65535
        %v774 = vshrl.u32 %v769, 16
        %v775 = vmul.u32 %v771, %v773
        %v776 = vmul.u32 %v771, %v774
        %v777 = vmul.u32 %v772, %v773
        %v778 = vmul.u32 %v772, %v774
        %v779 = vshll.u32 %v776, 16
        %v780 = vshrl.u32 %v776, 16
        %v781 = vshll.u32 %v777, 16
        %v782 = vshrl.u32 %v777, 16
        %vm783 = vc.u32 %v775, %v779
        %v784 = vsel %vm783, 1, 0
        %v785 = vadd.s32 %v775, %v779
        %v786 = vadd.s32 %v778, %v784
        %vm787 = vc.u32 %v785, %v781
        %v788 = vsel %vm787, 1, 0
        %v789 = vadd.s32 %v785, %v781
        %v790 = vadd.s32 %v786, %v788
        %v791 = vadd.s32 %v790, %v780
        %v792 = vadd.s32 %v791, %v782
        %v793 = vand.u32 %v770, 65535
        %v794 = vshrl.u32 %v770, 16
        %v795 = vand.u32 %v765, 65535
        %v796 = vshrl.u32 %v765, 16
        %v797 = vmul.u32 %v793, %v795
        %v798 = vmul.u32 %v793, %v796
        %v799 = vmul.u32 %v794, %v795
        %v800 = vmul.u32 %v794, %v796
        %v801 = vshll.u32 %v798, 16
        %v802 = vshrl.u32 %v798, 16
        %v803 = vshll.u32 %v799, 16
        %v804 = vshrl.u32 %v799, 16
        %vm805 = vc.u32 %v797, %v801
        %v806 = vsel %vm805, 1, 0
        %v807 = vadd.s32 %v797, %v801
        %v808 = vadd.s32 %v800, %v806
        %vm809 = vc.u32 %v807, %v803
        %v810 = vsel %vm809, 1, 0
        %v811 = vadd.s32 %v807, %v803
        %v812 = vadd.s32 %v808, %v810
        %v813 = vadd.s32 %v812, %v802
        %v814 = vadd.s32 %v813, %v804
        %v815 = vmul.u32 %v770, %v761
        %v816 = vadd.s32 %v792, %v811
        %vm817 = vc.u32 %v792, %v811
        %v818 = vadd.s32 %v814, 1
        %v819 = vsel %vm817, %v818, %v814
        %v820 = vadd.s32 %v815, %v819
        %v821 = vadd.s32 %v820, 536870912
        %v822 = vshrl.u32 %v821, 30
        %v823 = vshll.u32 %v822, 30
        %v824 = vsub.s32 %v820, %v823
        %vm825 = vcmp.lt.s32.totalorder %v824, 0
        %v826 = vsub.s32 0, %v824
        %v827 = vsel %vm825, %v826, %v824
        %v828 = vclz %v827
        %v829 = vsub.s32 %v828, 2
        %vm830 = vcmp.gt.s32.totalorder 0, %v829
        %v831 = vsel %vm830, 0, %v829
        %v832 = vsub.s32 32, %v831
        %v833 = vshll.u32 %v824, %v831
        %v834 = vshrl.u32 %v816, %v832
        %v835 = vor.u32 %v833, %v834
        %v836 = vsub.s32 4294967266, %v831
        %v837 = vadd.s32 %v836, 127
        %v838 = vshll.u32 %v837, 23
        %v839 = vor.u32 4788187, %v838
        %v840 = vand.u32 2147483647, %v839
        %v842 = vcvt.s32.f32 %v835
        %v843 = vmul.f32 %v842, %v840
        %v844 = vxor.u32 %v843, 2147483648
        %v845 = vsel %vm724, %v844, %v843
        %v846 = vsub.s32 4, %v822
        %v847 = vsel %vm724, %v846, %v822
        %v848 = vsel %vm723, %v406, %v845
        %v849 = vsel %vm723, 0, %v847
        %v850 = vmul.f32 %v848, %v848
        %v851 = vmul.f32 %v850, -0.001358992
        %v852 = vadd.f32 %v851, 0.041655596
        %v853 = vmul.f32 %v850, %v852
        %v854 = vadd.f32 %v853, -0.4999988
        %v855 = vmul.f32 %v850, %v854
        %v856 = vadd.f32 1.0, %v855
        %v857 = vmul.f32 %v848, %v848
        %v858 = vmul.f32 %v857, -0.00019511016
        %v859 = vadd.f32 %v858, 0.008332121
        %v860 = vmul.f32 %v857, %v859
        %v861 = vadd.f32 %v860, -0.16666654
        %v862 = vmul.f32 %v857, %v861
        %v863 = vadd.f32 %v862, 1.0
        %v864 = vmul.f32 %v863, %v848
        %vm865 = vweird.f32 %v406
        %v866 = vadd.s32 %v849, 3
        %v867 = vand.u32 %v866, 3
        %vm868 = vcmp.lt.s32.totalorder %v867, 2
        %vm869 = vcmp.eq.s32.totalorder %v867, 0
        %v870 = vxor.u32 %v864, 2147483648
        %v871 = vsel %vm869, %v856, %v870
        %vm872 = vcmp.eq.s32.totalorder %v867, 2
        %v873 = vxor.u32 %v856, 2147483648
        %v874 = vsel %vm872, %v873, %v864
        %v875 = vsel %vm868, %v871, %v874
        %v876 = vsel %vm865, nan, %v875
        %v877 = vand.u32 2147483647, %v407
        %vm878 = vcmp.le.f32.partialorder %v877, 0.7853982
        %vm879 = vcmp.lt.s32.totalorder %v407, 0
        %v880 = vand.u32 %v407, 2139095040
        %v881 = vshrl.u32 %v880, 23
        %v882 = vsub.s32 %v881, 127
        %v883 = vand.u32 2147483647, %v407
        %v884 = vand.u32 %v883, 8388607
        %v885 = vor.u32 %v884, 8388608
        %v886 = vsub.s32 0, %v885
        %v887 = vadd.s32 %v882, 1
        %vm888 = vcmp.gt.s32.totalorder %v887, 0
        %v889 = vsel %vm888, %v887, 0
        %v890 = vshrl.u32 %v889, 5
        %v891 = vand.u32 %v889, 31
        %v892 = vsub.s32 32, %v891
        %v893 = vshrl.u32 683565275, %v892
        %v894 = vshll.u32 683565275, %v891
        %v895 = vshrl.u32 2475754826, %v892
        %v896 = vor.u32 %v894, %v895
        %v897 = vshll.u32 2475754826, %v891
        %v898 = vshrl.u32 2131351028, %v892
        %v899 = vor.u32 %v897, %v898
        %v900 = vshll.u32 2131351028, %v891
        %v901 = vshrl.u32 2102212464, %v892
        %v902 = vor.u32 %v900, %v901
        %v903 = vshll.u32 2102212464, %v891
        %v904 = vshrl.u32 920167782, %v892
        %v905 = vor.u32 %v903, %v904
        %v906 = vshll.u32 920167782, %v891
        %v907 = vshrl.u32 1326507024, %v892
        %v908 = vor.u32 %v906, %v907
        %vm909 = vcmp.lt.s32.totalorder %v890, 1
        %vm910 = vcmp.lt.s32.totalorder %v890, 2
        %vm911 = vcmp.lt.s32.totalorder %v890, 3
        %vm912 = vcmp.lt.s32.totalorder %v890, 4
        %v913 = vsel %vm909, %v893, %v896
        %v914 = vsel %vm912, %v902, 2102212464
        %v915 = vsel %vm911, %v899, %v914
        %v916 = vsel %vm910, %v913, %v915
        %v917 = vsel %vm909, %v896, %v899
        %v918 = vsel %vm912, %v905, 920167782
        %v919 = vsel %vm911, %v902, %v918
        %v920 = vsel %vm910, %v917, %v919
        %v921 = vsel %vm909, %v899, %v902
        %v922 = vsel %vm912, %v908, 1326507024
        %v923 = vsel %vm911, %v905, %v922
        %v924 = vsel %vm910, %v921, %v923
        %v925 = vshll.u32 %v885, 8
        %v926 = vand.u32 %v925, 65535
        %v927 = vshrl.u32 %v925, 16
        %v928 = vand.u32 %v924, 65535
        %v929 = vshrl.u32 %v924, 16
        %v930 = vmul.u32 %v926, %v928
        %v931 = vmul.u32 %v926, %v929
        %v932 = vmul.u32 %v927, %v928
        %v933 = vmul.u32 %v927, %v929
        %v934 = vshll.u32 %v931, 16
        %v935 = vshrl.u32 %v931, 16
        %v936 = vshll.u32 %v932, 16
        %v937 = vshrl.u32 %v932, 16
        %vm938 = vc.u32 %v930, %v934
        %v939 = vsel %vm938, 1, 0
        %v940 = vadd.s32 %v930, %v934
        %v941 = vadd.s32 %v933, %v939
        %vm942 = vc.u32 %v940, %v936
        %v943 = vsel %vm942, 1, 0
        %v944 = vadd.s32 %v940, %v936
        %v945 = vadd.s32 %v941, %v943
        %v946 = vadd.s32 %v945, %v935
        %v947 = vadd.s32 %v946, %v937
        %v948 = vand.u32 %v925, 65535
        %v949 = vshrl.u32 %v925, 16
        %v950 = vand.u32 %v920, 65535
        %v951 = vshrl.u32 %v920, 16
        %v952 = vmul.u32 %v948, %v950
        %v953 = vmul.u32 %v948, %v951
        %v954 = vmul.u32 %v949, %v950
        %v955 = vmul.u32 %v949, %v951
        %v956 = vshll.u32 %v953, 16
        %v957 = vshrl.u32 %v953, 16
        %v958 = vshll.u32 %v954, 16
        %v959 = vshrl.u32 %v954, 16
        %vm960 = vc.u32 %v952, %v956
        %v961 = vsel %vm960, 1, 0
        %v962 = vadd.s32 %v952, %v956
        %v963 = vadd.s32 %v955, %v961
        %vm964 = vc.u32 %v962, %v958
        %v965 = vsel %vm964, 1, 0
        %v966 = vadd.s32 %v962, %v958
        %v967 = vadd.s32 %v963, %v965
        %v968 = vadd.s32 %v967, %v957
        %v969 = vadd.s32 %v968, %v959
        %v970 = vmul.u32 %v925, %v916
        %v971 = vadd.s32 %v947, %v966
        %vm972 = vc.u32 %v947, %v966
        %v973 = vadd.s32 %v969, 1
        %v974 = vsel %vm972, %v973, %v969
        %v975 = vadd.s32 %v970, %v974
        %v976 = vadd.s32 %v975, 536870912
        %v977 = vshrl.u32 %v976, 30
        %v978 = vshll.u32 %v977, 30
        %v979 = vsub.s32 %v975, %v978
        %vm980 = vcmp.lt.s32.totalorder %v979, 0
        %v981 = vsub.s32 0, %v979
        %v982 = vsel %vm980, %v981, %v979
        %v983 = vclz %v982
        %v984 = vsub.s32 %v983, 2
        %vm985 = vcmp.gt.s32.totalorder 0, %v984
        %v986 = vsel %vm985, 0, %v984
        %v987 = vsub.s32 32, %v986
        %v988 = vshll.u32 %v979, %v986
        %v989 = vshrl.u32 %v971, %v987
        %v990 = vor.u32 %v988, %v989
        %v991 = vsub.s32 4294967266, %v986
        %v992 = vadd.s32 %v991, 127
        %v993 = vshll.u32 %v992, 23
        %v994 = vor.u32 4788187, %v993
        %v995 = vand.u32 2147483647, %v994
        %v997 = vcvt.s32.f32 %v990
        %v998 = vmul.f32 %v997, %v995
        %v999 = vxor.u32 %v998, 2147483648
        %v1000 = vsel %vm879, %v999, %v998
        %v1001 = vsub.s32 4, %v977
        %v1002 = vsel %vm879, %v1001, %v977
        %v1003 = vsel %vm878, %v407, %v1000
        %v1004 = vsel %vm878, 0, %v1002
        %v1005 = vmul.f32 %v1003, %v1003
        %v1006 = vmul.f32 %v1005, -0.001358992
        %v1007 = vadd.f32 %v1006, 0.041655596
        %v1008 = vmul.f32 %v1005, %v1007
        %v1009 = vadd.f32 %v1008, -0.4999988
        %v1010 = vmul.f32 %v1005, %v1009
        %v1011 = vadd.f32 1.0, %v1010
        %v1012 = vmul.f32 %v1003, %v1003
        %v1013 = vmul.f32 %v1012, -0.00019511016
        %v1014 = vadd.f32 %v1013, 0.008332121
        %v1015 = vmul.f32 %v1012, %v1014
        %v1016 = vadd.f32 %v1015, -0.16666654
        %v1017 = vmul.f32 %v1012, %v1016
        %v1018 = vadd.f32 %v1017, 1.0
        %v1019 = vmul.f32 %v1018, %v1003
        %vm1020 = vweird.f32 %v407
        %v1021 = vadd.s32 %v1004, 3
        %v1022 = vand.u32 %v1021, 3
        %vm1023 = vcmp.lt.s32.totalorder %v1022, 2
        %vm1024 = vcmp.eq.s32.totalorder %v1022, 0
        %v1025 = vxor.u32 %v1019, 2147483648
        %v1026 = vsel %vm1024, %v1011, %v1025
        %vm1027 = vcmp.eq.s32.totalorder %v1022, 2
        %v1028 = vxor.u32 %v1011, 2147483648
        %v1029 = vsel %vm1027, %v1028, %v1019
        %v1030 = vsel %vm1023, %v1026, %v1029
        %v1031 = vsel %vm1020, nan, %v1030
        %v1032 = vand.u32 2147483647, %v408
        %vm1033 = vcmp.le.f32.partialorder %v1032, 0.7853982
        %vm1034 = vcmp.lt.s32.totalorder %v408, 0
        %v1035 = vand.u32 %v408, 2139095040
        %v1036 = vshrl.u32 %v1035, 23
        %v1037 = vsub.s32 %v1036, 127
        %v1038 = vand.u32 2147483647, %v408
        %v1039 = vand.u32 %v1038, 8388607
        %v1040 = vor.u32 %v1039, 8388608
        %v1041 = vsub.s32 0, %v1040
        %v1042 = vadd.s32 %v1037, 1
        %vm1043 = vcmp.gt.s32.totalorder %v1042, 0
        %v1044 = vsel %vm1043, %v1042, 0
        %v1045 = vshrl.u32 %v1044, 5
        %v1046 = vand.u32 %v1044, 31
        %v1047 = vsub.s32 32, %v1046
        %v1048 = vshrl.u32 683565275, %v1047
        %v1049 = vshll.u32 683565275, %v1046
        %v1050 = vshrl.u32 2475754826, %v1047
        %v1051 = vor.u32 %v1049, %v1050
        %v1052 = vshll.u32 2475754826, %v1046
        %v1053 = vshrl.u32 2131351028, %v1047
        %v1054 = vor.u32 %v1052, %v1053
        %v1055 = vshll.u32 2131351028, %v1046
        %v1056 = vshrl.u32 2102212464, %v1047
        %v1057 = vor.u32 %v1055, %v1056
        %v1058 = vshll.u32 2102212464, %v1046
        %v1059 = vshrl.u32 920167782, %v1047
        %v1060 = vor.u32 %v1058, %v1059
        %v1061 = vshll.u32 920167782, %v1046
        %v1062 = vshrl.u32 1326507024, %v1047
        %v1063 = vor.u32 %v1061, %v1062
        %vm1064 = vcmp.lt.s32.totalorder %v1045, 1
        %vm1065 = vcmp.lt.s32.totalorder %v1045, 2
        %vm1066 = vcmp.lt.s32.totalorder %v1045, 3
        %vm1067 = vcmp.lt.s32.totalorder %v1045, 4
        %v1068 = vsel %vm1064, %v1048, %v1051
        %v1069 = vsel %vm1067, %v1057, 2102212464
        %v1070 = vsel %vm1066, %v1054, %v1069
        %v1071 = vsel %vm1065, %v1068, %v1070
        %v1072 = vsel %vm1064, %v1051, %v1054
        %v1073 = vsel %vm1067, %v1060, 920167782
        %v1074 = vsel %vm1066, %v1057, %v1073
        %v1075 = vsel %vm1065, %v1072, %v1074
        %v1076 = vsel %vm1064, %v1054, %v1057
        %v1077 = vsel %vm1067, %v1063, 1326507024
        %v1078 = vsel %vm1066, %v1060, %v1077
        %v1079 = vsel %vm1065, %v1076, %v1078
        %v1080 = vshll.u32 %v1040, 8
        %v1081 = vand.u32 %v1080, 65535
        %v1082 = vshrl.u32 %v1080, 16
        %v1083 = vand.u32 %v1079, 65535
        %v1084 = vshrl.u32 %v1079, 16
        %v1085 = vmul.u32 %v1081, %v1083
        %v1086 = vmul.u32 %v1081, %v1084
        %v1087 = vmul.u32 %v1082, %v1083
        %v1088 = vmul.u32 %v1082, %v1084
        %v1089 = vshll.u32 %v1086, 16
        %v1090 = vshrl.u32 %v1086, 16
        %v1091 = vshll.u32 %v1087, 16
        %v1092 = vshrl.u32 %v1087, 16
        %vm1093 = vc.u32 %v1085, %v1089
        %v1094 = vsel %vm1093, 1, 0
        %v1095 = vadd.s32 %v1085, %v1089
        %v1096 = vadd.s32 %v1088, %v1094
        %vm1097 = vc.u32 %v1095, %v1091
        %v1098 = vsel %vm1097, 1, 0
        %v1099 = vadd.s32 %v1095, %v1091
        %v1100 = vadd.s32 %v1096, %v1098
        %v1101 = vadd.s32 %v1100, %v1090
        %v1102 = vadd.s32 %v1101, %v1092
        %v1103 = vand.u32 %v1080, 65535
        %v1104 = vshrl.u32 %v1080, 16
        %v1105 = vand.u32 %v1075, 65535
        %v1106 = vshrl.u32 %v1075, 16
        %v1107 = vmul.u32 %v1103, %v1105
        %v1108 = vmul.u32 %v1103, %v1106
        %v1109 = vmul.u32 %v1104, %v1105
        %v1110 = vmul.u32 %v1104, %v1106
        %v1111 = vshll.u32 %v1108, 16
        %v1112 = vshrl.u32 %v1108, 16
        %v1113 = vshll.u32 %v1109, 16
        %v1114 = vshrl.u32 %v1109, 16
        %vm1115 = vc.u32 %v1107, %v1111
        %v1116 = vsel %vm1115, 1, 0
        %v1117 = vadd.s32 %v1107, %v1111
        %v1118 = vadd.s32 %v1110, %v1116
        %vm1119 = vc.u32 %v1117, %v1113
        %v1120 = vsel %vm1119, 1, 0
        %v1121 = vadd.s32 %v1117, %v1113
        %v1122 = vadd.s32 %v1118, %v1120
        %v1123 = vadd.s32 %v1122, %v1112
        %v1124 = vadd.s32 %v1123, %v1114
        %v1125 = vmul.u32 %v1080, %v1071
        %v1126 = vadd.s32 %v1102, %v1121
        %vm1127 = vc.u32 %v1102, %v1121
        %v1128 = vadd.s32 %v1124, 1
        %v1129 = vsel %vm1127, %v1128, %v1124
        %v1130 = vadd.s32 %v1125, %v1129
        %v1131 = vadd.s32 %v1130, 536870912
        %v1132 = vshrl.u32 %v1131, 30
        %v1133 = vshll.u32 %v1132, 30
        %v1134 = vsub.s32 %v1130, %v1133
        %vm1135 = vcmp.lt.s32.totalorder %v1134, 0
        %v1136 = vsub.s32 0, %v1134
        %v1137 = vsel %vm1135, %v1136, %v1134
        %v1138 = vclz %v1137
        %v1139 = vsub.s32 %v1138, 2
        %vm1140 = vcmp.gt.s32.totalorder 0, %v1139
        %v1141 = vsel %vm1140, 0, %v1139
        %v1142 = vsub.s32 32, %v1141
        %v1143 = vshll.u32 %v1134, %v1141
        %v1144 = vshrl.u32 %v1126, %v1142
        %v1145 = vor.u32 %v1143, %v1144
        %v1146 = vsub.s32 4294967266, %v1141
        %v1147 = vadd.s32 %v1146, 127
        %v1148 = vshll.u32 %v1147, 23
        %v1149 = vor.u32 4788187, %v1148
        %v1150 = vand.u32 2147483647, %v1149
        %v1152 = vcvt.s32.f32 %v1145
        %v1153 = vmul.f32 %v1152, %v1150
        %v1154 = vxor.u32 %v1153, 2147483648
        %v1155 = vsel %vm1034, %v1154, %v1153
        %v1156 = vsub.s32 4, %v1132
        %v1157 = vsel %vm1034, %v1156, %v1132
        %v1158 = vsel %vm1033, %v408, %v1155
        %v1159 = vsel %vm1033, 0, %v1157
        %v1160 = vmul.f32 %v1158, %v1158
        %v1161 = vmul.f32 %v1160, -0.001358992
        %v1162 = vadd.f32 %v1161, 0.041655596
        %v1163 = vmul.f32 %v1160, %v1162
        %v1164 = vadd.f32 %v1163, -0.4999988
        %v1165 = vmul.f32 %v1160, %v1164
        %v1166 = vadd.f32 1.0, %v1165
        %v1167 = vmul.f32 %v1158, %v1158
        %v1168 = vmul.f32 %v1167, -0.00019511016
        %v1169 = vadd.f32 %v1168, 0.008332121
        %v1170 = vmul.f32 %v1167, %v1169
        %v1171 = vadd.f32 %v1170, -0.16666654
        %v1172 = vmul.f32 %v1167, %v1171
        %v1173 = vadd.f32 %v1172, 1.0
        %v1174 = vmul.f32 %v1173, %v1158
        %vm1175 = vweird.f32 %v408
        %v1176 = vadd.s32 %v1159, 3
        %v1177 = vand.u32 %v1176, 3
        %vm1178 = vcmp.lt.s32.totalorder %v1177, 2
        %vm1179 = vcmp.eq.s32.totalorder %v1177, 0
        %v1180 = vxor.u32 %v1174, 2147483648
        %v1181 = vsel %vm1179, %v1166, %v1180
        %vm1182 = vcmp.eq.s32.totalorder %v1177, 2
        %v1183 = vxor.u32 %v1166, 2147483648
        %v1184 = vsel %vm1182, %v1183, %v1174
        %v1185 = vsel %vm1178, %v1181, %v1184
        %v1186 = vsel %vm1175, nan, %v1185
        %v1187 = vand.u32 2147483647, %v409
        %vm1188 = vcmp.le.f32.partialorder %v1187, 0.7853982
        %vm1189 = vcmp.lt.s32.totalorder %v409, 0
        %v1190 = vand.u32 %v409, 2139095040
        %v1191 = vshrl.u32 %v1190, 23
        %v1192 = vsub.s32 %v1191, 127
        %v1193 = vand.u32 2147483647, %v409
        %v1194 = vand.u32 %v1193, 8388607
        %v1195 = vor.u32 %v1194, 8388608
        %v1196 = vsub.s32 0, %v1195
        %v1197 = vadd.s32 %v1192, 1
        %vm1198 = vcmp.gt.s32.totalorder %v1197, 0
        %v1199 = vsel %vm1198, %v1197, 0
        %v1200 = vshrl.u32 %v1199, 5
        %v1201 = vand.u32 %v1199, 31
        %v1202 = vsub.s32 32, %v1201
        %v1203 = vshrl.u32 683565275, %v1202
        %v1204 = vshll.u32 683565275, %v1201
        %v1205 = vshrl.u32 2475754826, %v1202
        %v1206 = vor.u32 %v1204, %v1205
        %v1207 = vshll.u32 2475754826, %v1201
        %v1208 = vshrl.u32 2131351028, %v1202
        %v1209 = vor.u32 %v1207, %v1208
        %v1210 = vshll.u32 2131351028, %v1201
        %v1211 = vshrl.u32 2102212464, %v1202
        %v1212 = vor.u32 %v1210, %v1211
        %v1213 = vshll.u32 2102212464, %v1201
        %v1214 = vshrl.u32 920167782, %v1202
        %v1215 = vor.u32 %v1213, %v1214
        %v1216 = vshll.u32 920167782, %v1201
        %v1217 = vshrl.u32 1326507024, %v1202
        %v1218 = vor.u32 %v1216, %v1217
        %vm1219 = vcmp.lt.s32.totalorder %v1200, 1
        %vm1220 = vcmp.lt.s32.totalorder %v1200, 2
        %vm1221 = vcmp.lt.s32.totalorder %v1200, 3
        %vm1222 = vcmp.lt.s32.totalorder %v1200, 4
        %v1223 = vsel %vm1219, %v1203, %v1206
        %v1224 = vsel %vm1222, %v1212, 2102212464
        %v1225 = vsel %vm1221, %v1209, %v1224
        %v1226 = vsel %vm1220, %v1223, %v1225
        %v1227 = vsel %vm1219, %v1206, %v1209
        %v1228 = vsel %vm1222, %v1215, 920167782
        %v1229 = vsel %vm1221, %v1212, %v1228
        %v1230 = vsel %vm1220, %v1227, %v1229
        %v1231 = vsel %vm1219, %v1209, %v1212
        %v1232 = vsel %vm1222, %v1218, 1326507024
        %v1233 = vsel %vm1221, %v1215, %v1232
        %v1234 = vsel %vm1220, %v1231, %v1233
        %v1235 = vshll.u32 %v1195, 8
        %v1236 = vand.u32 %v1235, 65535
        %v1237 = vshrl.u32 %v1235, 16
        %v1238 = vand.u32 %v1234, 65535
        %v1239 = vshrl.u32 %v1234, 16
        %v1240 = vmul.u32 %v1236, %v1238
        %v1241 = vmul.u32 %v1236, %v1239
        %v1242 = vmul.u32 %v1237, %v1238
        %v1243 = vmul.u32 %v1237, %v1239
        %v1244 = vshll.u32 %v1241, 16
        %v1245 = vshrl.u32 %v1241, 16
        %v1246 = vshll.u32 %v1242, 16
        %v1247 = vshrl.u32 %v1242, 16
        %vm1248 = vc.u32 %v1240, %v1244
        %v1249 = vsel %vm1248, 1, 0
        %v1250 = vadd.s32 %v1240, %v1244
        %v1251 = vadd.s32 %v1243, %v1249
        %vm1252 = vc.u32 %v1250, %v1246
        %v1253 = vsel %vm1252, 1, 0
        %v1254 = vadd.s32 %v1250, %v1246
        %v1255 = vadd.s32 %v1251, %v1253
        %v1256 = vadd.s32 %v1255, %v1245
        %v1257 = vadd.s32 %v1256, %v1247
        %v1258 = vand.u32 %v1235, 65535
        %v1259 = vshrl.u32 %v1235, 16
        %v1260 = vand.u32 %v1230, 65535
        %v1261 = vshrl.u32 %v1230, 16
        %v1262 = vmul.u32 %v1258, %v1260
        %v1263 = vmul.u32 %v1258, %v1261
        %v1264 = vmul.u32 %v1259, %v1260
        %v1265 = vmul.u32 %v1259, %v1261
        %v1266 = vshll.u32 %v1263, 16
        %v1267 = vshrl.u32 %v1263, 16
        %v1268 = vshll.u32 %v1264, 16
        %v1269 = vshrl.u32 %v1264, 16
        %vm1270 = vc.u32 %v1262, %v1266
        %v1271 = vsel %vm1270, 1, 0
        %v1272 = vadd.s32 %v1262, %v1266
        %v1273 = vadd.s32 %v1265, %v1271
        %vm1274 = vc.u32 %v1272, %v1268
        %v1275 = vsel %vm1274, 1, 0
        %v1276 = vadd.s32 %v1272, %v1268
        %v1277 = vadd.s32 %v1273, %v1275
        %v1278 = vadd.s32 %v1277, %v1267
        %v1279 = vadd.s32 %v1278, %v1269
        %v1280 = vmul.u32 %v1235, %v1226
        %v1281 = vadd.s32 %v1257, %v1276
        %vm1282 = vc.u32 %v1257, %v1276
        %v1283 = vadd.s32 %v1279, 1
        %v1284 = vsel %vm1282, %v1283, %v1279
        %v1285 = vadd.s32 %v1280, %v1284
        %v1286 = vadd.s32 %v1285, 536870912
        %v1287 = vshrl.u32 %v1286, 30
        %v1288 = vshll.u32 %v1287, 30
        %v1289 = vsub.s32 %v1285, %v1288
        %vm1290 = vcmp.lt.s32.totalorder %v1289, 0
        %v1291 = vsub.s32 0, %v1289
        %v1292 = vsel %vm1290, %v1291, %v1289
        %v1293 = vclz %v1292
        %v1294 = vsub.s32 %v1293, 2
        %vm1295 = vcmp.gt.s32.totalorder 0, %v1294
        %v1296 = vsel %vm1295, 0, %v1294
        %v1297 = vsub.s32 32, %v1296
        %v1298 = vshll.u32 %v1289, %v1296
        %v1299 = vshrl.u32 %v1281, %v1297
        %v1300 = vor.u32 %v1298, %v1299
        %v1301 = vsub.s32 4294967266, %v1296
        %v1302 = vadd.s32 %v1301, 127
        %v1303 = vshll.u32 %v1302, 23
        %v1304 = vor.u32 4788187, %v1303
        %v1305 = vand.u32 2147483647, %v1304
        %v1307 = vcvt.s32.f32 %v1300
        %v1308 = vmul.f32 %v1307, %v1305
        %v1309 = vxor.u32 %v1308, 2147483648
        %v1310 = vsel %vm1189, %v1309, %v1308
        %v1311 = vsub.s32 4, %v1287
        %v1312 = vsel %vm1189, %v1311, %v1287
        %v1313 = vsel %vm1188, %v409, %v1310
        %v1314 = vsel %vm1188, 0, %v1312
        %v1315 = vmul.f32 %v1313, %v1313
        %v1316 = vmul.f32 %v1315, -0.001358992
        %v1317 = vadd.f32 %v1316, 0.041655596
        %v1318 = vmul.f32 %v1315, %v1317
        %v1319 = vadd.f32 %v1318, -0.4999988
        %v1320 = vmul.f32 %v1315, %v1319
        %v1321 = vadd.f32 1.0, %v1320
        %v1322 = vmul.f32 %v1313, %v1313
        %v1323 = vmul.f32 %v1322, -0.00019511016
        %v1324 = vadd.f32 %v1323, 0.008332121
        %v1325 = vmul.f32 %v1322, %v1324
        %v1326 = vadd.f32 %v1325, -0.16666654
        %v1327 = vmul.f32 %v1322, %v1326
        %v1328 = vadd.f32 %v1327, 1.0
        %v1329 = vmul.f32 %v1328, %v1313
        %vm1330 = vweird.f32 %v409
        %v1331 = vadd.s32 %v1314, 3
        %v1332 = vand.u32 %v1331, 3
        %vm1333 = vcmp.lt.s32.totalorder %v1332, 2
        %vm1334 = vcmp.eq.s32.totalorder %v1332, 0
        %v1335 = vxor.u32 %v1329, 2147483648
        %v1336 = vsel %vm1334, %v1321, %v1335
        %vm1337 = vcmp.eq.s32.totalorder %v1332, 2
        %v1338 = vxor.u32 %v1321, 2147483648
        %v1339 = vsel %vm1337, %v1338, %v1329
        %v1340 = vsel %vm1333, %v1336, %v1339
        %v1341 = vsel %vm1330, nan, %v1340
        %v1342 = vand.u32 2147483647, %v410
        %vm1343 = vcmp.le.f32.partialorder %v1342, 0.7853982
        %vm1344 = vcmp.lt.s32.totalorder %v410, 0
        %v1345 = vand.u32 %v410, 2139095040
        %v1346 = vshrl.u32 %v1345, 23
        %v1347 = vsub.s32 %v1346, 127
        %v1348 = vand.u32 2147483647, %v410
        %v1349 = vand.u32 %v1348, 8388607
        %v1350 = vor.u32 %v1349, 8388608
        %v1351 = vsub.s32 0, %v1350
        %v1352 = vadd.s32 %v1347, 1
        %vm1353 = vcmp.gt.s32.totalorder %v1352, 0
        %v1354 = vsel %vm1353, %v1352, 0
        %v1355 = vshrl.u32 %v1354, 5
        %v1356 = vand.u32 %v1354, 31
        %v1357 = vsub.s32 32, %v1356
        %v1358 = vshrl.u32 683565275, %v1357
        %v1359 = vshll.u32 683565275, %v1356
        %v1360 = vshrl.u32 2475754826, %v1357
        %v1361 = vor.u32 %v1359, %v1360
        %v1362 = vshll.u32 2475754826, %v1356
        %v1363 = vshrl.u32 2131351028, %v1357
        %v1364 = vor.u32 %v1362, %v1363
        %v1365 = vshll.u32 2131351028, %v1356
        %v1366 = vshrl.u32 2102212464, %v1357
        %v1367 = vor.u32 %v1365, %v1366
        %v1368 = vshll.u32 2102212464, %v1356
        %v1369 = vshrl.u32 920167782, %v1357
        %v1370 = vor.u32 %v1368, %v1369
        %v1371 = vshll.u32 920167782, %v1356
        %v1372 = vshrl.u32 1326507024, %v1357
        %v1373 = vor.u32 %v1371, %v1372
        %vm1374 = vcmp.lt.s32.totalorder %v1355, 1
        %vm1375 = vcmp.lt.s32.totalorder %v1355, 2
        %vm1376 = vcmp.lt.s32.totalorder %v1355, 3
        %vm1377 = vcmp.lt.s32.totalorder %v1355, 4
        %v1378 = vsel %vm1374, %v1358, %v1361
        %v1379 = vsel %vm1377, %v1367, 2102212464
        %v1380 = vsel %vm1376, %v1364, %v1379
        %v1381 = vsel %vm1375, %v1378, %v1380
        %v1382 = vsel %vm1374, %v1361, %v1364
        %v1383 = vsel %vm1377, %v1370, 920167782
        %v1384 = vsel %vm1376, %v1367, %v1383
        %v1385 = vsel %vm1375, %v1382, %v1384
        %v1386 = vsel %vm1374, %v1364, %v1367
        %v1387 = vsel %vm1377, %v1373, 1326507024
        %v1388 = vsel %vm1376, %v1370, %v1387
        %v1389 = vsel %vm1375, %v1386, %v1388
        %v1390 = vshll.u32 %v1350, 8
        %v1391 = vand.u32 %v1390, 65535
        %v1392 = vshrl.u32 %v1390, 16
        %v1393 = vand.u32 %v1389, 65535
        %v1394 = vshrl.u32 %v1389, 16
        %v1395 = vmul.u32 %v1391, %v1393
        %v1396 = vmul.u32 %v1391, %v1394
        %v1397 = vmul.u32 %v1392, %v1393
        %v1398 = vmul.u32 %v1392, %v1394
        %v1399 = vshll.u32 %v1396, 16
        %v1400 = vshrl.u32 %v1396, 16
        %v1401 = vshll.u32 %v1397, 16
        %v1402 = vshrl.u32 %v1397, 16
        %vm1403 = vc.u32 %v1395, %v1399
        %v1404 = vsel %vm1403, 1, 0
        %v1405 = vadd.s32 %v1395, %v1399
        %v1406 = vadd.s32 %v1398, %v1404
        %vm1407 = vc.u32 %v1405, %v1401
        %v1408 = vsel %vm1407, 1, 0
        %v1409 = vadd.s32 %v1405, %v1401
        %v1410 = vadd.s32 %v1406, %v1408
        %v1411 = vadd.s32 %v1410, %v1400
        %v1412 = vadd.s32 %v1411, %v1402
        %v1413 = vand.u32 %v1390, 65535
        %v1414 = vshrl.u32 %v1390, 16
        %v1415 = vand.u32 %v1385, 65535
        %v1416 = vshrl.u32 %v1385, 16
        %v1417 = vmul.u32 %v1413, %v1415
        %v1418 = vmul.u32 %v1413, %v1416
        %v1419 = vmul.u32 %v1414, %v1415
        %v1420 = vmul.u32 %v1414, %v1416
        %v1421 = vshll.u32 %v1418, 16
        %v1422 = vshrl.u32 %v1418, 16
        %v1423 = vshll.u32 %v1419, 16
        %v1424 = vshrl.u32 %v1419, 16
        %vm1425 = vc.u32 %v1417, %v1421
        %v1426 = vsel %vm1425, 1, 0
        %v1427 = vadd.s32 %v1417, %v1421
        %v1428 = vadd.s32 %v1420, %v1426
        %vm1429 = vc.u32 %v1427, %v1423
        %v1430 = vsel %vm1429, 1, 0
        %v1431 = vadd.s32 %v1427, %v1423
        %v1432 = vadd.s32 %v1428, %v1430
        %v1433 = vadd.s32 %v1432, %v1422
        %v1434 = vadd.s32 %v1433, %v1424
        %v1435 = vmul.u32 %v1390, %v1381
        %v1436 = vadd.s32 %v1412, %v1431
        %vm1437 = vc.u32 %v1412, %v1431
        %v1438 = vadd.s32 %v1434, 1
        %v1439 = vsel %vm1437, %v1438, %v1434
        %v1440 = vadd.s32 %v1435, %v1439
        %v1441 = vadd.s32 %v1440, 536870912
        %v1442 = vshrl.u32 %v1441, 30
        %v1443 = vshll.u32 %v1442, 30
        %v1444 = vsub.s32 %v1440, %v1443
        %vm1445 = vcmp.lt.s32.totalorder %v1444, 0
        %v1446 = vsub.s32 0, %v1444
        %v1447 = vsel %vm1445, %v1446, %v1444
        %v1448 = vclz %v1447
        %v1449 = vsub.s32 %v1448, 2
        %vm1450 = vcmp.gt.s32.totalorder 0, %v1449
        %v1451 = vsel %vm1450, 0, %v1449
        %v1452 = vsub.s32 32, %v1451
        %v1453 = vshll.u32 %v1444, %v1451
        %v1454 = vshrl.u32 %v1436, %v1452
        %v1455 = vor.u32 %v1453, %v1454
        %v1456 = vsub.s32 4294967266, %v1451
        %v1457 = vadd.s32 %v1456, 127
        %v1458 = vshll.u32 %v1457, 23
        %v1459 = vor.u32 4788187, %v1458
        %v1460 = vand.u32 2147483647, %v1459
        %v1462 = vcvt.s32.f32 %v1455
        %v1463 = vmul.f32 %v1462, %v1460
        %v1464 = vxor.u32 %v1463, 2147483648
        %v1465 = vsel %vm1344, %v1464, %v1463
        %v1466 = vsub.s32 4, %v1442
        %v1467 = vsel %vm1344, %v1466, %v1442
        %v1468 = vsel %vm1343, %v410, %v1465
        %v1469 = vsel %vm1343, 0, %v1467
        %v1470 = vmul.f32 %v1468, %v1468
        %v1471 = vmul.f32 %v1470, -0.001358992
        %v1472 = vadd.f32 %v1471, 0.041655596
        %v1473 = vmul.f32 %v1470, %v1472
        %v1474 = vadd.f32 %v1473, -0.4999988
        %v1475 = vmul.f32 %v1470, %v1474
        %v1476 = vadd.f32 1.0, %v1475
        %v1477 = vmul.f32 %v1468, %v1468
        %v1478 = vmul.f32 %v1477, -0.00019511016
        %v1479 = vadd.f32 %v1478, 0.008332121
        %v1480 = vmul.f32 %v1477, %v1479
        %v1481 = vadd.f32 %v1480, -0.16666654
        %v1482 = vmul.f32 %v1477, %v1481
        %v1483 = vadd.f32 %v1482, 1.0
        %v1484 = vmul.f32 %v1483, %v1468
        %vm1485 = vweird.f32 %v410
        %v1486 = vadd.s32 %v1469, 3
        %v1487 = vand.u32 %v1486, 3
        %vm1488 = vcmp.lt.s32.totalorder %v1487, 2
        %vm1489 = vcmp.eq.s32.totalorder %v1487, 0
        %v1490 = vxor.u32 %v1484, 2147483648
        %v1491 = vsel %vm1489, %v1476, %v1490
        %vm1492 = vcmp.eq.s32.totalorder %v1487, 2
        %v1493 = vxor.u32 %v1476, 2147483648
        %v1494 = vsel %vm1492, %v1493, %v1484
        %v1495 = vsel %vm1488, %v1491, %v1494
        %v1496 = vsel %vm1485, nan, %v1495
        %v1497 = vand.u32 2147483647, %v404
        %vm1498 = vcmp.le.f32.partialorder %v1497, 0.7853982
        %vm1499 = vcmp.lt.s32.totalorder %v404, 0
        %v1500 = vand.u32 %v404, 2139095040
        %v1501 = vshrl.u32 %v1500, 23
        %v1502 = vsub.s32 %v1501, 127
        %v1503 = vand.u32 2147483647, %v404
        %v1504 = vand.u32 %v1503, 8388607
        %v1505 = vor.u32 %v1504, 8388608
        %v1506 = vsub.s32 0, %v1505
        %v1507 = vadd.s32 %v1502, 1
        %vm1508 = vcmp.gt.s32.totalorder %v1507, 0
        %v1509 = vsel %vm1508, %v1507, 0
        %v1510 = vshrl.u32 %v1509, 5
        %v1511 = vand.u32 %v1509, 31
        %v1512 = vsub.s32 32, %v1511
        %v1513 = vshrl.u32 683565275, %v1512
        %v1514 = vshll.u32 683565275, %v1511
        %v1515 = vshrl.u32 2475754826, %v1512
        %v1516 = vor.u32 %v1514, %v1515
        %v1517 = vshll.u32 2475754826, %v1511
        %v1518 = vshrl.u32 2131351028, %v1512
        %v1519 = vor.u32 %v1517, %v1518
        %v1520 = vshll.u32 2131351028, %v1511
        %v1521 = vshrl.u32 2102212464, %v1512
        %v1522 = vor.u32 %v1520, %v1521
        %v1523 = vshll.u32 2102212464, %v1511
        %v1524 = vshrl.u32 920167782, %v1512
        %v1525 = vor.u32 %v1523, %v1524
        %v1526 = vshll.u32 920167782, %v1511
        %v1527 = vshrl.u32 1326507024, %v1512
        %v1528 = vor.u32 %v1526, %v1527
        %vm1529 = vcmp.lt.s32.totalorder %v1510, 1
        %vm1530 = vcmp.lt.s32.totalorder %v1510, 2
        %vm1531 = vcmp.lt.s32.totalorder %v1510, 3
        %vm1532 = vcmp.lt.s32.totalorder %v1510, 4
        %v1533 = vsel %vm1529, %v1513, %v1516
        %v1534 = vsel %vm1532, %v1522, 2102212464
        %v1535 = vsel %vm1531, %v1519, %v1534
        %v1536 = vsel %vm1530, %v1533, %v1535
        %v1537 = vsel %vm1529, %v1516, %v1519
        %v1538 = vsel %vm1532, %v1525, 920167782
        %v1539 = vsel %vm1531, %v1522, %v1538
        %v1540 = vsel %vm1530, %v1537, %v1539
        %v1541 = vsel %vm1529, %v1519, %v1522
        %v1542 = vsel %vm1532, %v1528, 1326507024
        %v1543 = vsel %vm1531, %v1525, %v1542
        %v1544 = vsel %vm1530, %v1541, %v1543
        %v1545 = vshll.u32 %v1505, 8
        %v1546 = vand.u32 %v1545, 65535
        %v1547 = vshrl.u32 %v1545, 16
        %v1548 = vand.u32 %v1544, 65535
        %v1549 = vshrl.u32 %v1544, 16
        %v1550 = vmul.u32 %v1546, %v1548
        %v1551 = vmul.u32 %v1546, %v1549
        %v1552 = vmul.u32 %v1547, %v1548
        %v1553 = vmul.u32 %v1547, %v1549
        %v1554 = vshll.u32 %v1551, 16
        %v1555 = vshrl.u32 %v1551, 16
        %v1556 = vshll.u32 %v1552, 16
        %v1557 = vshrl.u32 %v1552, 16
        %vm1558 = vc.u32 %v1550, %v1554
        %v1559 = vsel %vm1558, 1, 0
        %v1560 = vadd.s32 %v1550, %v1554
        %v1561 = vadd.s32 %v1553, %v1559
        %vm1562 = vc.u32 %v1560, %v1556
        %v1563 = vsel %vm1562, 1, 0
        %v1564 = vadd.s32 %v1560, %v1556
        %v1565 = vadd.s32 %v1561, %v1563
        %v1566 = vadd.s32 %v1565, %v1555
        %v1567 = vadd.s32 %v1566, %v1557
        %v1568 = vand.u32 %v1545, 65535
        %v1569 = vshrl.u32 %v1545, 16
        %v1570 = vand.u32 %v1540, 65535
        %v1571 = vshrl.u32 %v1540, 16
        %v1572 = vmul.u32 %v1568, %v1570
        %v1573 = vmul.u32 %v1568, %v1571
        %v1574 = vmul.u32 %v1569, %v1570
        %v1575 = vmul.u32 %v1569, %v1571
        %v1576 = vshll.u32 %v1573, 16
        %v1577 = vshrl.u32 %v1573, 16
        %v1578 = vshll.u32 %v1574, 16
        %v1579 = vshrl.u32 %v1574, 16
        %vm1580 = vc.u32 %v1572, %v1576
        %v1581 = vsel %vm1580, 1, 0
        %v1582 = vadd.s32 %v1572, %v1576
        %v1583 = vadd.s32 %v1575, %v1581
        %vm1584 = vc.u32 %v1582, %v1578
        %v1585 = vsel %vm1584, 1, 0
        %v1586 = vadd.s32 %v1582, %v1578
        %v1587 = vadd.s32 %v1583, %v1585
        %v1588 = vadd.s32 %v1587, %v1577
        %v1589 = vadd.s32 %v1588, %v1579
        %v1590 = vmul.u32 %v1545, %v1536
        %v1591 = vadd.s32 %v1567, %v1586
        %vm1592 = vc.u32 %v1567, %v1586
        %v1593 = vadd.s32 %v1589, 1
        %v1594 = vsel %vm1592, %v1593, %v1589
        %v1595 = vadd.s32 %v1590, %v1594
        %v1596 = vadd.s32 %v1595, 536870912
        %v1597 = vshrl.u32 %v1596, 30
        %v1598 = vshll.u32 %v1597, 30
        %v1599 = vsub.s32 %v1595, %v1598
        %vm1600 = vcmp.lt.s32.totalorder %v1599, 0
        %v1601 = vsub.s32 0, %v1599
        %v1602 = vsel %vm1600, %v1601, %v1599
        %v1603 = vclz %v1602
        %v1604 = vsub.s32 %v1603, 2
        %vm1605 = vcmp.gt.s32.totalorder 0, %v1604
        %v1606 = vsel %vm1605, 0, %v1604
        %v1607 = vsub.s32 32, %v1606
        %v1608 = vshll.u32 %v1599, %v1606
        %v1609 = vshrl.u32 %v1591, %v1607
        %v1610 = vor.u32 %v1608, %v1609
        %v1611 = vsub.s32 4294967266, %v1606
        %v1612 = vadd.s32 %v1611, 127
        %v1613 = vshll.u32 %v1612, 23
        %v1614 = vor.u32 4788187, %v1613
        %v1615 = vand.u32 2147483647, %v1614
        %v1617 = vcvt.s32.f32 %v1610
        %v1618 = vmul.f32 %v1617, %v1615
        %v1619 = vxor.u32 %v1618, 2147483648
        %v1620 = vsel %vm1499, %v1619, %v1618
        %v1621 = vsub.s32 4, %v1597
        %v1622 = vsel %vm1499, %v1621, %v1597
        %v1623 = vsel %vm1498, %v404, %v1620
        %v1624 = vsel %vm1498, 0, %v1622
        %v1625 = vmul.f32 %v1623, %v1623
        %v1626 = vmul.f32 %v1625, -0.001358992
        %v1627 = vadd.f32 %v1626, 0.041655596
        %v1628 = vmul.f32 %v1625, %v1627
        %v1629 = vadd.f32 %v1628, -0.4999988
        %v1630 = vmul.f32 %v1625, %v1629
        %v1631 = vadd.f32 1.0, %v1630
        %v1632 = vmul.f32 %v1623, %v1623
        %v1633 = vmul.f32 %v1632, -0.00019511016
        %v1634 = vadd.f32 %v1633, 0.008332121
        %v1635 = vmul.f32 %v1632, %v1634
        %v1636 = vadd.f32 %v1635, -0.16666654
        %v1637 = vmul.f32 %v1632, %v1636
        %v1638 = vadd.f32 %v1637, 1.0
        %v1639 = vmul.f32 %v1638, %v1623
        %vm1640 = vweird.f32 %v404
        %v1641 = vand.u32 %v1624, 3
        %vm1642 = vcmp.lt.s32.totalorder %v1641, 2
        %vm1643 = vcmp.eq.s32.totalorder %v1641, 0
        %v1644 = vxor.u32 %v1639, 2147483648
        %v1645 = vsel %vm1643, %v1631, %v1644
        %vm1646 = vcmp.eq.s32.totalorder %v1641, 2
        %v1647 = vxor.u32 %v1631, 2147483648
        %v1648 = vsel %vm1646, %v1647, %v1639
        %v1649 = vsel %vm1642, %v1645, %v1648
        %v1650 = vsel %vm1640, nan, %v1649
        %v1651 = vand.u32 2147483647, %v405
        %vm1652 = vcmp.le.f32.partialorder %v1651, 0.7853982
        %vm1653 = vcmp.lt.s32.totalorder %v405, 0
        %v1654 = vand.u32 %v405, 2139095040
        %v1655 = vshrl.u32 %v1654, 23
        %v1656 = vsub.s32 %v1655, 127
        %v1657 = vand.u32 2147483647, %v405
        %v1658 = vand.u32 %v1657, 8388607
        %v1659 = vor.u32 %v1658, 8388608
        %v1660 = vsub.s32 0, %v1659
        %v1661 = vadd.s32 %v1656, 1
        %vm1662 = vcmp.gt.s32.totalorder %v1661, 0
        %v1663 = vsel %vm1662, %v1661, 0
        %v1664 = vshrl.u32 %v1663, 5
        %v1665 = vand.u32 %v1663, 31
        %v1666 = vsub.s32 32, %v1665
        %v1667 = vshrl.u32 683565275, %v1666
        %v1668 = vshll.u32 683565275, %v1665
        %v1669 = vshrl.u32 2475754826, %v1666
        %v1670 = vor.u32 %v1668, %v1669
        %v1671 = vshll.u32 2475754826, %v1665
        %v1672 = vshrl.u32 2131351028, %v1666
        %v1673 = vor.u32 %v1671, %v1672
        %v1674 = vshll.u32 2131351028, %v1665
        %v1675 = vshrl.u32 2102212464, %v1666
        %v1676 = vor.u32 %v1674, %v1675
        %v1677 = vshll.u32 2102212464, %v1665
        %v1678 = vshrl.u32 920167782, %v1666
        %v1679 = vor.u32 %v1677, %v1678
        %v1680 = vshll.u32 920167782, %v1665
        %v1681 = vshrl.u32 1326507024, %v1666
        %v1682 = vor.u32 %v1680, %v1681
        %vm1683 = vcmp.lt.s32.totalorder %v1664, 1
        %vm1684 = vcmp.lt.s32.totalorder %v1664, 2
        %vm1685 = vcmp.lt.s32.totalorder %v1664, 3
        %vm1686 = vcmp.lt.s32.totalorder %v1664, 4
        %v1687 = vsel %vm1683, %v1667, %v1670
        %v1688 = vsel %vm1686, %v1676, 2102212464
        %v1689 = vsel %vm1685, %v1673, %v1688
        %v1690 = vsel %vm1684, %v1687, %v1689
        %v1691 = vsel %vm1683, %v1670, %v1673
        %v1692 = vsel %vm1686, %v1679, 920167782
        %v1693 = vsel %vm1685, %v1676, %v1692
        %v1694 = vsel %vm1684, %v1691, %v1693
        %v1695 = vsel %vm1683, %v1673, %v1676
        %v1696 = vsel %vm1686, %v1682, 1326507024
        %v1697 = vsel %vm1685, %v1679, %v1696
        %v1698 = vsel %vm1684, %v1695, %v1697
        %v1699 = vshll.u32 %v1659, 8
        %v1700 = vand.u32 %v1699, 65535
        %v1701 = vshrl.u32 %v1699, 16
        %v1702 = vand.u32 %v1698, 65535
        %v1703 = vshrl.u32 %v1698, 16
        %v1704 = vmul.u32 %v1700, %v1702
        %v1705 = vmul.u32 %v1700, %v1703
        %v1706 = vmul.u32 %v1701, %v1702
        %v1707 = vmul.u32 %v1701, %v1703
        %v1708 = vshll.u32 %v1705, 16
        %v1709 = vshrl.u32 %v1705, 16
        %v1710 = vshll.u32 %v1706, 16
        %v1711 = vshrl.u32 %v1706, 16
        %vm1712 = vc.u32 %v1704, %v1708
        %v1713 = vsel %vm1712, 1, 0
        %v1714 = vadd.s32 %v1704, %v1708
        %v1715 = vadd.s32 %v1707, %v1713
        %vm1716 = vc.u32 %v1714, %v1710
        %v1717 = vsel %vm1716, 1, 0
        %v1718 = vadd.s32 %v1714, %v1710
        %v1719 = vadd.s32 %v1715, %v1717
        %v1720 = vadd.s32 %v1719, %v1709
        %v1721 = vadd.s32 %v1720, %v1711
        %v1722 = vand.u32 %v1699, 65535
        %v1723 = vshrl.u32 %v1699, 16
        %v1724 = vand.u32 %v1694, 65535
        %v1725 = vshrl.u32 %v1694, 16
        %v1726 = vmul.u32 %v1722, %v1724
        %v1727 = vmul.u32 %v1722, %v1725
        %v1728 = vmul.u32 %v1723, %v1724
        %v1729 = vmul.u32 %v1723, %v1725
        %v1730 = vshll.u32 %v1727, 16
        %v1731 = vshrl.u32 %v1727, 16
        %v1732 = vshll.u32 %v1728, 16
        %v1733 = vshrl.u32 %v1728, 16
        %vm1734 = vc.u32 %v1726, %v1730
        %v1735 = vsel %vm1734, 1, 0
        %v1736 = vadd.s32 %v1726, %v1730
        %v1737 = vadd.s32 %v1729, %v1735
        %vm1738 = vc.u32 %v1736, %v1732
        %v1739 = vsel %vm1738, 1, 0
        %v1740 = vadd.s32 %v1736, %v1732
        %v1741 = vadd.s32 %v1737, %v1739
        %v1742 = vadd.s32 %v1741, %v1731
        %v1743 = vadd.s32 %v1742, %v1733
        %v1744 = vmul.u32 %v1699, %v1690
        %v1745 = vadd.s32 %v1721, %v1740
        %vm1746 = vc.u32 %v1721, %v1740
        %v1747 = vadd.s32 %v1743, 1
        %v1748 = vsel %vm1746, %v1747, %v1743
        %v1749 = vadd.s32 %v1744, %v1748
        %v1750 = vadd.s32 %v1749, 536870912
        %v1751 = vshrl.u32 %v1750, 30
        %v1752 = vshll.u32 %v1751, 30
        %v1753 = vsub.s32 %v1749, %v1752
        %vm1754 = vcmp.lt.s32.totalorder %v1753, 0
        %v1755 = vsub.s32 0, %v1753
        %v1756 = vsel %vm1754, %v1755, %v1753
        %v1757 = vclz %v1756
        %v1758 = vsub.s32 %v1757, 2
        %vm1759 = vcmp.gt.s32.totalorder 0, %v1758
        %v1760 = vsel %vm1759, 0, %v1758
        %v1761 = vsub.s32 32, %v1760
        %v1762 = vshll.u32 %v1753, %v1760
        %v1763 = vshrl.u32 %v1745, %v1761
        %v1764 = vor.u32 %v1762, %v1763
        %v1765 = vsub.s32 4294967266, %v1760
        %v1766 = vadd.s32 %v1765, 127
        %v1767 = vshll.u32 %v1766, 23
        %v1768 = vor.u32 4788187, %v1767
        %v1769 = vand.u32 2147483647, %v1768
        %v1771 = vcvt.s32.f32 %v1764
        %v1772 = vmul.f32 %v1771, %v1769
        %v1773 = vxor.u32 %v1772, 2147483648
        %v1774 = vsel %vm1653, %v1773, %v1772
        %v1775 = vsub.s32 4, %v1751
        %v1776 = vsel %vm1653, %v1775, %v1751
        %v1777 = vsel %vm1652, %v405, %v1774
        %v1778 = vsel %vm1652, 0, %v1776
        %v1779 = vmul.f32 %v1777, %v1777
        %v1780 = vmul.f32 %v1779, -0.001358992
        %v1781 = vadd.f32 %v1780, 0.041655596
        %v1782 = vmul.f32 %v1779, %v1781
        %v1783 = vadd.f32 %v1782, -0.4999988
        %v1784 = vmul.f32 %v1779, %v1783
        %v1785 = vadd.f32 1.0, %v1784
        %v1786 = vmul.f32 %v1777, %v1777
        %v1787 = vmul.f32 %v1786, -0.00019511016
        %v1788 = vadd.f32 %v1787, 0.008332121
        %v1789 = vmul.f32 %v1786, %v1788
        %v1790 = vadd.f32 %v1789, -0.16666654
        %v1791 = vmul.f32 %v1786, %v1790
        %v1792 = vadd.f32 %v1791, 1.0
        %v1793 = vmul.f32 %v1792, %v1777
        %vm1794 = vweird.f32 %v405
        %v1795 = vand.u32 %v1778, 3
        %vm1796 = vcmp.lt.s32.totalorder %v1795, 2
        %vm1797 = vcmp.eq.s32.totalorder %v1795, 0
        %v1798 = vxor.u32 %v1793, 2147483648
        %v1799 = vsel %vm1797, %v1785, %v1798
        %vm1800 = vcmp.eq.s32.totalorder %v1795, 2
        %v1801 = vxor.u32 %v1785, 2147483648
        %v1802 = vsel %vm1800, %v1801, %v1793
        %v1803 = vsel %vm1796, %v1799, %v1802
        %v1804 = vsel %vm1794, nan, %v1803
        %v1805 = vand.u32 2147483647, %v406
        %vm1806 = vcmp.le.f32.partialorder %v1805, 0.7853982
        %vm1807 = vcmp.lt.s32.totalorder %v406, 0
        %v1808 = vand.u32 %v406, 2139095040
        %v1809 = vshrl.u32 %v1808, 23
        %v1810 = vsub.s32 %v1809, 127
        %v1811 = vand.u32 2147483647, %v406
        %v1812 = vand.u32 %v1811, 8388607
        %v1813 = vor.u32 %v1812, 8388608
        %v1814 = vsub.s32 0, %v1813
        %v1815 = vadd.s32 %v1810, 1
        %vm1816 = vcmp.gt.s32.totalorder %v1815, 0
        %v1817 = vsel %vm1816, %v1815, 0
        %v1818 = vshrl.u32 %v1817, 5
        %v1819 = vand.u32 %v1817, 31
        %v1820 = vsub.s32 32, %v1819
        %v1821 = vshrl.u32 683565275, %v1820
        %v1822 = vshll.u32 683565275, %v1819
        %v1823 = vshrl.u32 2475754826, %v1820
        %v1824 = vor.u32 %v1822, %v1823
        %v1825 = vshll.u32 2475754826, %v1819
        %v1826 = vshrl.u32 2131351028, %v1820
        %v1827 = vor.u32 %v1825, %v1826
        %v1828 = vshll.u32 2131351028, %v1819
        %v1829 = vshrl.u32 2102212464, %v1820
        %v1830 = vor.u32 %v1828, %v1829
        %v1831 = vshll.u32 2102212464, %v1819
        %v1832 = vshrl.u32 920167782, %v1820
        %v1833 = vor.u32 %v1831, %v1832
        %v1834 = vshll.u32 920167782, %v1819
        %v1835 = vshrl.u32 1326507024, %v1820
        %v1836 = vor.u32 %v1834, %v1835
        %vm1837 = vcmp.lt.s32.totalorder %v1818, 1
        %vm1838 = vcmp.lt.s32.totalorder %v1818, 2
        %vm1839 = vcmp.lt.s32.totalorder %v1818, 3
        %vm1840 = vcmp.lt.s32.totalorder %v1818, 4
        %v1841 = vsel %vm1837, %v1821, %v1824
        %v1842 = vsel %vm1840, %v1830, 2102212464
        %v1843 = vsel %vm1839, %v1827, %v1842
        %v1844 = vsel %vm1838, %v1841, %v1843
        %v1845 = vsel %vm1837, %v1824, %v1827
        %v1846 = vsel %vm1840, %v1833, 920167782
        %v1847 = vsel %vm1839, %v1830, %v1846
        %v1848 = vsel %vm1838, %v1845, %v1847
        %v1849 = vsel %vm1837, %v1827, %v1830
        %v1850 = vsel %vm1840, %v1836, 1326507024
        %v1851 = vsel %vm1839, %v1833, %v1850
        %v1852 = vsel %vm1838, %v1849, %v1851
        %v1853 = vshll.u32 %v1813, 8
        %v1854 = vand.u32 %v1853, 65535
        %v1855 = vshrl.u32 %v1853, 16
        %v1856 = vand.u32 %v1852, 65535
        %v1857 = vshrl.u32 %v1852, 16
        %v1858 = vmul.u32 %v1854, %v1856
        %v1859 = vmul.u32 %v1854, %v1857
        %v1860 = vmul.u32 %v1855, %v1856
        %v1861 = vmul.u32 %v1855, %v1857
        %v1862 = vshll.u32 %v1859, 16
        %v1863 = vshrl.u32 %v1859, 16
        %v1864 = vshll.u32 %v1860, 16
        %v1865 = vshrl.u32 %v1860, 16
        %vm1866 = vc.u32 %v1858, %v1862
        %v1867 = vsel %vm1866, 1, 0
        %v1868 = vadd.s32 %v1858, %v1862
        %v1869 = vadd.s32 %v1861, %v1867
        %vm1870 = vc.u32 %v1868, %v1864
        %v1871 = vsel %vm1870, 1, 0
        %v1872 = vadd.s32 %v1868, %v1864
        %v1873 = vadd.s32 %v1869, %v1871
        %v1874 = vadd.s32 %v1873, %v1863
        %v1875 = vadd.s32 %v1874, %v1865
        %v1876 = vand.u32 %v1853, 65535
        %v1877 = vshrl.u32 %v1853, 16
        %v1878 = vand.u32 %v1848, 65535
        %v1879 = vshrl.u32 %v1848, 16
        %v1880 = vmul.u32 %v1876, %v1878
        %v1881 = vmul.u32 %v1876, %v1879
        %v1882 = vmul.u32 %v1877, %v1878
        %v1883 = vmul.u32 %v1877, %v1879
        %v1884 = vshll.u32 %v1881, 16
        %v1885 = vshrl.u32 %v1881, 16
        %v1886 = vshll.u32 %v1882, 16
        %v1887 = vshrl.u32 %v1882, 16
        %vm1888 = vc.u32 %v1880, %v1884
        %v1889 = vsel %vm1888, 1, 0
        %v1890 = vadd.s32 %v1880, %v1884
        %v1891 = vadd.s32 %v1883, %v1889
        %vm1892 = vc.u32 %v1890, %v1886
        %v1893 = vsel %vm1892, 1, 0
        %v1894 = vadd.s32 %v1890, %v1886
        %v1895 = vadd.s32 %v1891, %v1893
        %v1896 = vadd.s32 %v1895, %v1885
        %v1897 = vadd.s32 %v1896, %v1887
        %v1898 = vmul.u32 %v1853, %v1844
        %v1899 = vadd.s32 %v1875, %v1894
        %vm1900 = vc.u32 %v1875, %v1894
        %v1901 = vadd.s32 %v1897, 1
        %v1902 = vsel %vm1900, %v1901, %v1897
        %v1903 = vadd.s32 %v1898, %v1902
        %v1904 = vadd.s32 %v1903, 536870912
        %v1905 = vshrl.u32 %v1904, 30
        %v1906 = vshll.u32 %v1905, 30
        %v1907 = vsub.s32 %v1903, %v1906
        %vm1908 = vcmp.lt.s32.totalorder %v1907, 0
        %v1909 = vsub.s32 0, %v1907
        %v1910 = vsel %vm1908, %v1909, %v1907
        %v1911 = vclz %v1910
        %v1912 = vsub.s32 %v1911, 2
        %vm1913 = vcmp.gt.s32.totalorder 0, %v1912
        %v1914 = vsel %vm1913, 0, %v1912
        %v1915 = vsub.s32 32, %v1914
        %v1916 = vshll.u32 %v1907, %v1914
        %v1917 = vshrl.u32 %v1899, %v1915
        %v1918 = vor.u32 %v1916, %v1917
        %v1919 = vsub.s32 4294967266, %v1914
        %v1920 = vadd.s32 %v1919, 127
        %v1921 = vshll.u32 %v1920, 23
        %v1922 = vor.u32 4788187, %v1921
        %v1923 = vand.u32 2147483647, %v1922
        %v1925 = vcvt.s32.f32 %v1918
        %v1926 = vmul.f32 %v1925, %v1923
        %v1927 = vxor.u32 %v1926, 2147483648
        %v1928 = vsel %vm1807, %v1927, %v1926
        %v1929 = vsub.s32 4, %v1905
        %v1930 = vsel %vm1807, %v1929, %v1905
        %v1931 = vsel %vm1806, %v406, %v1928
        %v1932 = vsel %vm1806, 0, %v1930
        %v1933 = vmul.f32 %v1931, %v1931
        %v1934 = vmul.f32 %v1933, -0.001358992
        %v1935 = vadd.f32 %v1934, 0.041655596
        %v1936 = vmul.f32 %v1933, %v1935
        %v1937 = vadd.f32 %v1936, -0.4999988
        %v1938 = vmul.f32 %v1933, %v1937
        %v1939 = vadd.f32 1.0, %v1938
        %v1940 = vmul.f32 %v1931, %v1931
        %v1941 = vmul.f32 %v1940, -0.00019511016
        %v1942 = vadd.f32 %v1941, 0.008332121
        %v1943 = vmul.f32 %v1940, %v1942
        %v1944 = vadd.f32 %v1943, -0.16666654
        %v1945 = vmul.f32 %v1940, %v1944
        %v1946 = vadd.f32 %v1945, 1.0
        %v1947 = vmul.f32 %v1946, %v1931
        %vm1948 = vweird.f32 %v406
        %v1949 = vand.u32 %v1932, 3
        %vm1950 = vcmp.lt.s32.totalorder %v1949, 2
        %vm1951 = vcmp.eq.s32.totalorder %v1949, 0
        %v1952 = vxor.u32 %v1947, 2147483648
        %v1953 = vsel %vm1951, %v1939, %v1952
        %vm1954 = vcmp.eq.s32.totalorder %v1949, 2
        %v1955 = vxor.u32 %v1939, 2147483648
        %v1956 = vsel %vm1954, %v1955, %v1947
        %v1957 = vsel %vm1950, %v1953, %v1956
        %v1958 = vsel %vm1948, nan, %v1957
        %v1959 = vand.u32 2147483647, %v407
        %vm1960 = vcmp.le.f32.partialorder %v1959, 0.7853982
        %vm1961 = vcmp.lt.s32.totalorder %v407, 0
        %v1962 = vand.u32 %v407, 2139095040
        %v1963 = vshrl.u32 %v1962, 23
        %v1964 = vsub.s32 %v1963, 127
        %v1965 = vand.u32 2147483647, %v407
        %v1966 = vand.u32 %v1965, 8388607
        %v1967 = vor.u32 %v1966, 8388608
        %v1968 = vsub.s32 0, %v1967
        %v1969 = vadd.s32 %v1964, 1
        %vm1970 = vcmp.gt.s32.totalorder %v1969, 0
        %v1971 = vsel %vm1970, %v1969, 0
        %v1972 = vshrl.u32 %v1971, 5
        %v1973 = vand.u32 %v1971, 31
        %v1974 = vsub.s32 32, %v1973
        %v1975 = vshrl.u32 683565275, %v1974
        %v1976 = vshll.u32 683565275, %v1973
        %v1977 = vshrl.u32 2475754826, %v1974
        %v1978 = vor.u32 %v1976, %v1977
        %v1979 = vshll.u32 2475754826, %v1973
        %v1980 = vshrl.u32 2131351028, %v1974
        %v1981 = vor.u32 %v1979, %v1980
        %v1982 = vshll.u32 2131351028, %v1973
        %v1983 = vshrl.u32 2102212464, %v1974
        %v1984 = vor.u32 %v1982, %v1983
        %v1985 = vshll.u32 2102212464, %v1973
        %v1986 = vshrl.u32 920167782, %v1974
        %v1987 = vor.u32 %v1985, %v1986
        %v1988 = vshll.u32 920167782, %v1973
        %v1989 = vshrl.u32 1326507024, %v1974
        %v1990 = vor.u32 %v1988, %v1989
        %vm1991 = vcmp.lt.s32.totalorder %v1972, 1
        %vm1992 = vcmp.lt.s32.totalorder %v1972, 2
        %vm1993 = vcmp.lt.s32.totalorder %v1972, 3
        %vm1994 = vcmp.lt.s32.totalorder %v1972, 4
        %v1995 = vsel %vm1991, %v1975, %v1978
        %v1996 = vsel %vm1994, %v1984, 2102212464
        %v1997 = vsel %vm1993, %v1981, %v1996
        %v1998 = vsel %vm1992, %v1995, %v1997
        %v1999 = vsel %vm1991, %v1978, %v1981
        %v2000 = vsel %vm1994, %v1987, 920167782
        %v2001 = vsel %vm1993, %v1984, %v2000
        %v2002 = vsel %vm1992, %v1999, %v2001
        %v2003 = vsel %vm1991, %v1981, %v1984
        %v2004 = vsel %vm1994, %v1990, 1326507024
        %v2005 = vsel %vm1993, %v1987, %v2004
        %v2006 = vsel %vm1992, %v2003, %v2005
        %v2007 = vshll.u32 %v1967, 8
        %v2008 = vand.u32 %v2007, 65535
        %v2009 = vshrl.u32 %v2007, 16
        %v2010 = vand.u32 %v2006, 65535
        %v2011 = vshrl.u32 %v2006, 16
        %v2012 = vmul.u32 %v2008, %v2010
        %v2013 = vmul.u32 %v2008, %v2011
        %v2014 = vmul.u32 %v2009, %v2010
        %v2015 = vmul.u32 %v2009, %v2011
        %v2016 = vshll.u32 %v2013, 16
        %v2017 = vshrl.u32 %v2013, 16
        %v2018 = vshll.u32 %v2014, 16
        %v2019 = vshrl.u32 %v2014, 16
        %vm2020 = vc.u32 %v2012, %v2016
        %v2021 = vsel %vm2020, 1, 0
        %v2022 = vadd.s32 %v2012, %v2016
        %v2023 = vadd.s32 %v2015, %v2021
        %vm2024 = vc.u32 %v2022, %v2018
        %v2025 = vsel %vm2024, 1, 0
        %v2026 = vadd.s32 %v2022, %v2018
        %v2027 = vadd.s32 %v2023, %v2025
        %v2028 = vadd.s32 %v2027, %v2017
        %v2029 = vadd.s32 %v2028, %v2019
        %v2030 = vand.u32 %v2007, 65535
        %v2031 = vshrl.u32 %v2007, 16
        %v2032 = vand.u32 %v2002, 65535
        %v2033 = vshrl.u32 %v2002, 16
        %v2034 = vmul.u32 %v2030, %v2032
        %v2035 = vmul.u32 %v2030, %v2033
        %v2036 = vmul.u32 %v2031, %v2032
        %v2037 = vmul.u32 %v2031, %v2033
        %v2038 = vshll.u32 %v2035, 16
        %v2039 = vshrl.u32 %v2035, 16
        %v2040 = vshll.u32 %v2036, 16
        %v2041 = vshrl.u32 %v2036, 16
        %vm2042 = vc.u32 %v2034, %v2038
        %v2043 = vsel %vm2042, 1, 0
        %v2044 = vadd.s32 %v2034, %v2038
        %v2045 = vadd.s32 %v2037, %v2043
        %vm2046 = vc.u32 %v2044, %v2040
        %v2047 = vsel %vm2046, 1, 0
        %v2048 = vadd.s32 %v2044, %v2040
        %v2049 = vadd.s32 %v2045, %v2047
        %v2050 = vadd.s32 %v2049, %v2039
        %v2051 = vadd.s32 %v2050, %v2041
        %v2052 = vmul.u32 %v2007, %v1998
        %v2053 = vadd.s32 %v2029, %v2048
        %vm2054 = vc.u32 %v2029, %v2048
        %v2055 = vadd.s32 %v2051, 1
        %v2056 = vsel %vm2054, %v2055, %v2051
        %v2057 = vadd.s32 %v2052, %v2056
        %v2058 = vadd.s32 %v2057, 536870912
        %v2059 = vshrl.u32 %v2058, 30
        %v2060 = vshll.u32 %v2059, 30
        %v2061 = vsub.s32 %v2057, %v2060
        %vm2062 = vcmp.lt.s32.totalorder %v2061, 0
        %v2063 = vsub.s32 0, %v2061
        %v2064 = vsel %vm2062, %v2063, %v2061
        %v2065 = vclz %v2064
        %v2066 = vsub.s32 %v2065, 2
        %vm2067 = vcmp.gt.s32.totalorder 0, %v2066
        %v2068 = vsel %vm2067, 0, %v2066
        %v2069 = vsub.s32 32, %v2068
        %v2070 = vshll.u32 %v2061, %v2068
        %v2071 = vshrl.u32 %v2053, %v2069
        %v2072 = vor.u32 %v2070, %v2071
        %v2073 = vsub.s32 4294967266, %v2068
        %v2074 = vadd.s32 %v2073, 127
        %v2075 = vshll.u32 %v2074, 23
        %v2076 = vor.u32 4788187, %v2075
        %v2077 = vand.u32 2147483647, %v2076
        %v2079 = vcvt.s32.f32 %v2072
        %v2080 = vmul.f32 %v2079, %v2077
        %v2081 = vxor.u32 %v2080, 2147483648
        %v2082 = vsel %vm1961, %v2081, %v2080
        %v2083 = vsub.s32 4, %v2059
        %v2084 = vsel %vm1961, %v2083, %v2059
        %v2085 = vsel %vm1960, %v407, %v2082
        %v2086 = vsel %vm1960, 0, %v2084
        %v2087 = vmul.f32 %v2085, %v2085
        %v2088 = vmul.f32 %v2087, -0.001358992
        %v2089 = vadd.f32 %v2088, 0.041655596
        %v2090 = vmul.f32 %v2087, %v2089
        %v2091 = vadd.f32 %v2090, -0.4999988
        %v2092 = vmul.f32 %v2087, %v2091
        %v2093 = vadd.f32 1.0, %v2092
        %v2094 = vmul.f32 %v2085, %v2085
        %v2095 = vmul.f32 %v2094, -0.00019511016
        %v2096 = vadd.f32 %v2095, 0.008332121
        %v2097 = vmul.f32 %v2094, %v2096
        %v2098 = vadd.f32 %v2097, -0.16666654
        %v2099 = vmul.f32 %v2094, %v2098
        %v2100 = vadd.f32 %v2099, 1.0
        %v2101 = vmul.f32 %v2100, %v2085
        %vm2102 = vweird.f32 %v407
        %v2103 = vand.u32 %v2086, 3
        %vm2104 = vcmp.lt.s32.totalorder %v2103, 2
        %vm2105 = vcmp.eq.s32.totalorder %v2103, 0
        %v2106 = vxor.u32 %v2101, 2147483648
        %v2107 = vsel %vm2105, %v2093, %v2106
        %vm2108 = vcmp.eq.s32.totalorder %v2103, 2
        %v2109 = vxor.u32 %v2093, 2147483648
        %v2110 = vsel %vm2108, %v2109, %v2101
        %v2111 = vsel %vm2104, %v2107, %v2110
        %v2112 = vsel %vm2102, nan, %v2111
        %v2113 = vand.u32 2147483647, %v408
        %vm2114 = vcmp.le.f32.partialorder %v2113, 0.7853982
        %vm2115 = vcmp.lt.s32.totalorder %v408, 0
        %v2116 = vand.u32 %v408, 2139095040
        %v2117 = vshrl.u32 %v2116, 23
        %v2118 = vsub.s32 %v2117, 127
        %v2119 = vand.u32 2147483647, %v408
        %v2120 = vand.u32 %v2119, 8388607
        %v2121 = vor.u32 %v2120, 8388608
        %v2122 = vsub.s32 0, %v2121
        %v2123 = vadd.s32 %v2118, 1
        %vm2124 = vcmp.gt.s32.totalorder %v2123, 0
        %v2125 = vsel %vm2124, %v2123, 0
        %v2126 = vshrl.u32 %v2125, 5
        %v2127 = vand.u32 %v2125, 31
        %v2128 = vsub.s32 32, %v2127
        %v2129 = vshrl.u32 683565275, %v2128
        %v2130 = vshll.u32 683565275, %v2127
        %v2131 = vshrl.u32 2475754826, %v2128
        %v2132 = vor.u32 %v2130, %v2131
        %v2133 = vshll.u32 2475754826, %v2127
        %v2134 = vshrl.u32 2131351028, %v2128
        %v2135 = vor.u32 %v2133, %v2134
        %v2136 = vshll.u32 2131351028, %v2127
        %v2137 = vshrl.u32 2102212464, %v2128
        %v2138 = vor.u32 %v2136, %v2137
        %v2139 = vshll.u32 2102212464, %v2127
        %v2140 = vshrl.u32 920167782, %v2128
        %v2141 = vor.u32 %v2139, %v2140
        %v2142 = vshll.u32 920167782, %v2127
        %v2143 = vshrl.u32 1326507024, %v2128
        %v2144 = vor.u32 %v2142, %v2143
        %vm2145 = vcmp.lt.s32.totalorder %v2126, 1
        %vm2146 = vcmp.lt.s32.totalorder %v2126, 2
        %vm2147 = vcmp.lt.s32.totalorder %v2126, 3
        %vm2148 = vcmp.lt.s32.totalorder %v2126, 4
        %v2149 = vsel %vm2145, %v2129, %v2132
        %v2150 = vsel %vm2148, %v2138, 2102212464
        %v2151 = vsel %vm2147, %v2135, %v2150
        %v2152 = vsel %vm2146, %v2149, %v2151
        %v2153 = vsel %vm2145, %v2132, %v2135
        %v2154 = vsel %vm2148, %v2141, 920167782
        %v2155 = vsel %vm2147, %v2138, %v2154
        %v2156 = vsel %vm2146, %v2153, %v2155
        %v2157 = vsel %vm2145, %v2135, %v2138
        %v2158 = vsel %vm2148, %v2144, 1326507024
        %v2159 = vsel %vm2147, %v2141, %v2158
        %v2160 = vsel %vm2146, %v2157, %v2159
        %v2161 = vshll.u32 %v2121, 8
        %v2162 = vand.u32 %v2161, 65535
        %v2163 = vshrl.u32 %v2161, 16
        %v2164 = vand.u32 %v2160, 65535
        %v2165 = vshrl.u32 %v2160, 16
        %v2166 = vmul.u32 %v2162, %v2164
        %v2167 = vmul.u32 %v2162, %v2165
        %v2168 = vmul.u32 %v2163, %v2164
        %v2169 = vmul.u32 %v2163, %v2165
        %v2170 = vshll.u32 %v2167, 16
        %v2171 = vshrl.u32 %v2167, 16
        %v2172 = vshll.u32 %v2168, 16
        %v2173 = vshrl.u32 %v2168, 16
        %vm2174 = vc.u32 %v2166, %v2170
        %v2175 = vsel %vm2174, 1, 0
        %v2176 = vadd.s32 %v2166, %v2170
        %v2177 = vadd.s32 %v2169, %v2175
        %vm2178 = vc.u32 %v2176, %v2172
        %v2179 = vsel %vm2178, 1, 0
        %v2180 = vadd.s32 %v2176, %v2172
        %v2181 = vadd.s32 %v2177, %v2179
        %v2182 = vadd.s32 %v2181, %v2171
        %v2183 = vadd.s32 %v2182, %v2173
        %v2184 = vand.u32 %v2161, 65535
        %v2185 = vshrl.u32 %v2161, 16
        %v2186 = vand.u32 %v2156, 65535
        %v2187 = vshrl.u32 %v2156, 16
        %v2188 = vmul.u32 %v2184, %v2186
        %v2189 = vmul.u32 %v2184, %v2187
        %v2190 = vmul.u32 %v2185, %v2186
        %v2191 = vmul.u32 %v2185, %v2187
        %v2192 = vshll.u32 %v2189, 16
        %v2193 = vshrl.u32 %v2189, 16
        %v2194 = vshll.u32 %v2190, 16
        %v2195 = vshrl.u32 %v2190, 16
        %vm2196 = vc.u32 %v2188, %v2192
        %v2197 = vsel %vm2196, 1, 0
        %v2198 = vadd.s32 %v2188, %v2192
        %v2199 = vadd.s32 %v2191, %v2197
        %vm2200 = vc.u32 %v2198, %v2194
        %v2201 = vsel %vm2200, 1, 0
        %v2202 = vadd.s32 %v2198, %v2194
        %v2203 = vadd.s32 %v2199, %v2201
        %v2204 = vadd.s32 %v2203, %v2193
        %v2205 = vadd.s32 %v2204, %v2195
        %v2206 = vmul.u32 %v2161, %v2152
        %v2207 = vadd.s32 %v2183, %v2202
        %vm2208 = vc.u32 %v2183, %v2202
        %v2209 = vadd.s32 %v2205, 1
        %v2210 = vsel %vm2208, %v2209, %v2205
        %v2211 = vadd.s32 %v2206, %v2210
        %v2212 = vadd.s32 %v2211, 536870912
        %v2213 = vshrl.u32 %v2212, 30
        %v2214 = vshll.u32 %v2213, 30
        %v2215 = vsub.s32 %v2211, %v2214
        %vm2216 = vcmp.lt.s32.totalorder %v2215, 0
        %v2217 = vsub.s32 0, %v2215
        %v2218 = vsel %vm2216, %v2217, %v2215
        %v2219 = vclz %v2218
        %v2220 = vsub.s32 %v2219, 2
        %vm2221 = vcmp.gt.s32.totalorder 0, %v2220
        %v2222 = vsel %vm2221, 0, %v2220
        %v2223 = vsub.s32 32, %v2222
        %v2224 = vshll.u32 %v2215, %v2222
        %v2225 = vshrl.u32 %v2207, %v2223
        %v2226 = vor.u32 %v2224, %v2225
        %v2227 = vsub.s32 4294967266, %v2222
        %v2228 = vadd.s32 %v2227, 127
        %v2229 = vshll.u32 %v2228, 23
        %v2230 = vor.u32 4788187, %v2229
        %v2231 = vand.u32 2147483647, %v2230
        %v2233 = vcvt.s32.f32 %v2226
        %v2234 = vmul.f32 %v2233, %v2231
        %v2235 = vxor.u32 %v2234, 2147483648
        %v2236 = vsel %vm2115, %v2235, %v2234
        %v2237 = vsub.s32 4, %v2213
        %v2238 = vsel %vm2115, %v2237, %v2213
        %v2239 = vsel %vm2114, %v408, %v2236
        %v2240 = vsel %vm2114, 0, %v2238
        %v2241 = vmul.f32 %v2239, %v2239
        %v2242 = vmul.f32 %v2241, -0.001358992
        %v2243 = vadd.f32 %v2242, 0.041655596
        %v2244 = vmul.f32 %v2241, %v2243
        %v2245 = vadd.f32 %v2244, -0.4999988
        %v2246 = vmul.f32 %v2241, %v2245
        %v2247 = vadd.f32 1.0, %v2246
        %v2248 = vmul.f32 %v2239, %v2239
        %v2249 = vmul.f32 %v2248, -0.00019511016
        %v2250 = vadd.f32 %v2249, 0.008332121
        %v2251 = vmul.f32 %v2248, %v2250
        %v2252 = vadd.f32 %v2251, -0.16666654
        %v2253 = vmul.f32 %v2248, %v2252
        %v2254 = vadd.f32 %v2253, 1.0
        %v2255 = vmul.f32 %v2254, %v2239
        %vm2256 = vweird.f32 %v408
        %v2257 = vand.u32 %v2240, 3
        %vm2258 = vcmp.lt.s32.totalorder %v2257, 2
        %vm2259 = vcmp.eq.s32.totalorder %v2257, 0
        %v2260 = vxor.u32 %v2255, 2147483648
        %v2261 = vsel %vm2259, %v2247, %v2260
        %vm2262 = vcmp.eq.s32.totalorder %v2257, 2
        %v2263 = vxor.u32 %v2247, 2147483648
        %v2264 = vsel %vm2262, %v2263, %v2255
        %v2265 = vsel %vm2258, %v2261, %v2264
        %v2266 = vsel %vm2256, nan, %v2265
        %v2267 = vand.u32 2147483647, %v409
        %vm2268 = vcmp.le.f32.partialorder %v2267, 0.7853982
        %vm2269 = vcmp.lt.s32.totalorder %v409, 0
        %v2270 = vand.u32 %v409, 2139095040
        %v2271 = vshrl.u32 %v2270, 23
        %v2272 = vsub.s32 %v2271, 127
        %v2273 = vand.u32 2147483647, %v409
        %v2274 = vand.u32 %v2273, 8388607
        %v2275 = vor.u32 %v2274, 8388608
        %v2276 = vsub.s32 0, %v2275
        %v2277 = vadd.s32 %v2272, 1
        %vm2278 = vcmp.gt.s32.totalorder %v2277, 0
        %v2279 = vsel %vm2278, %v2277, 0
        %v2280 = vshrl.u32 %v2279, 5
        %v2281 = vand.u32 %v2279, 31
        %v2282 = vsub.s32 32, %v2281
        %v2283 = vshrl.u32 683565275, %v2282
        %v2284 = vshll.u32 683565275, %v2281
        %v2285 = vshrl.u32 2475754826, %v2282
        %v2286 = vor.u32 %v2284, %v2285
        %v2287 = vshll.u32 2475754826, %v2281
        %v2288 = vshrl.u32 2131351028, %v2282
        %v2289 = vor.u32 %v2287, %v2288
        %v2290 = vshll.u32 2131351028, %v2281
        %v2291 = vshrl.u32 2102212464, %v2282
        %v2292 = vor.u32 %v2290, %v2291
        %v2293 = vshll.u32 2102212464, %v2281
        %v2294 = vshrl.u32 920167782, %v2282
        %v2295 = vor.u32 %v2293, %v2294
        %v2296 = vshll.u32 920167782, %v2281
        %v2297 = vshrl.u32 1326507024, %v2282
        %v2298 = vor.u32 %v2296, %v2297
        %vm2299 = vcmp.lt.s32.totalorder %v2280, 1
        %vm2300 = vcmp.lt.s32.totalorder %v2280, 2
        %vm2301 = vcmp.lt.s32.totalorder %v2280, 3
        %vm2302 = vcmp.lt.s32.totalorder %v2280, 4
        %v2303 = vsel %vm2299, %v2283, %v2286
        %v2304 = vsel %vm2302, %v2292, 2102212464
        %v2305 = vsel %vm2301, %v2289, %v2304
        %v2306 = vsel %vm2300, %v2303, %v2305
        %v2307 = vsel %vm2299, %v2286, %v2289
        %v2308 = vsel %vm2302, %v2295, 920167782
        %v2309 = vsel %vm2301, %v2292, %v2308
        %v2310 = vsel %vm2300, %v2307, %v2309
        %v2311 = vsel %vm2299, %v2289, %v2292
        %v2312 = vsel %vm2302, %v2298, 1326507024
        %v2313 = vsel %vm2301, %v2295, %v2312
        %v2314 = vsel %vm2300, %v2311, %v2313
        %v2315 = vshll.u32 %v2275, 8
        %v2316 = vand.u32 %v2315, 65535
        %v2317 = vshrl.u32 %v2315, 16
        %v2318 = vand.u32 %v2314, 65535
        %v2319 = vshrl.u32 %v2314, 16
        %v2320 = vmul.u32 %v2316, %v2318
        %v2321 = vmul.u32 %v2316, %v2319
        %v2322 = vmul.u32 %v2317, %v2318
        %v2323 = vmul.u32 %v2317, %v2319
        %v2324 = vshll.u32 %v2321, 16
        %v2325 = vshrl.u32 %v2321, 16
        %v2326 = vshll.u32 %v2322, 16
        %v2327 = vshrl.u32 %v2322, 16
        %vm2328 = vc.u32 %v2320, %v2324
        %v2329 = vsel %vm2328, 1, 0
        %v2330 = vadd.s32 %v2320, %v2324
        %v2331 = vadd.s32 %v2323, %v2329
        %vm2332 = vc.u32 %v2330, %v2326
        %v2333 = vsel %vm2332, 1, 0
        %v2334 = vadd.s32 %v2330, %v2326
        %v2335 = vadd.s32 %v2331, %v2333
        %v2336 = vadd.s32 %v2335, %v2325
        %v2337 = vadd.s32 %v2336, %v2327
        %v2338 = vand.u32 %v2315, 65535
        %v2339 = vshrl.u32 %v2315, 16
        %v2340 = vand.u32 %v2310, 65535
        %v2341 = vshrl.u32 %v2310, 16
        %v2342 = vmul.u32 %v2338, %v2340
        %v2343 = vmul.u32 %v2338, %v2341
        %v2344 = vmul.u32 %v2339, %v2340
        %v2345 = vmul.u32 %v2339, %v2341
        %v2346 = vshll.u32 %v2343, 16
        %v2347 = vshrl.u32 %v2343, 16
        %v2348 = vshll.u32 %v2344, 16
        %v2349 = vshrl.u32 %v2344, 16
        %vm2350 = vc.u32 %v2342, %v2346
        %v2351 = vsel %vm2350, 1, 0
        %v2352 = vadd.s32 %v2342, %v2346
        %v2353 = vadd.s32 %v2345, %v2351
        %vm2354 = vc.u32 %v2352, %v2348
        %v2355 = vsel %vm2354, 1, 0
        %v2356 = vadd.s32 %v2352, %v2348
        %v2357 = vadd.s32 %v2353, %v2355
        %v2358 = vadd.s32 %v2357, %v2347
        %v2359 = vadd.s32 %v2358, %v2349
        %v2360 = vmul.u32 %v2315, %v2306
        %v2361 = vadd.s32 %v2337, %v2356
        %vm2362 = vc.u32 %v2337, %v2356
        %v2363 = vadd.s32 %v2359, 1
        %v2364 = vsel %vm2362, %v2363, %v2359
        %v2365 = vadd.s32 %v2360, %v2364
        %v2366 = vadd.s32 %v2365, 536870912
        %v2367 = vshrl.u32 %v2366, 30
        %v2368 = vshll.u32 %v2367, 30
        %v2369 = vsub.s32 %v2365, %v2368
        %vm2370 = vcmp.lt.s32.totalorder %v2369, 0
        %v2371 = vsub.s32 0, %v2369
        %v2372 = vsel %vm2370, %v2371, %v2369
        %v2373 = vclz %v2372
        %v2374 = vsub.s32 %v2373, 2
        %vm2375 = vcmp.gt.s32.totalorder 0, %v2374
        %v2376 = vsel %vm2375, 0, %v2374
        %v2377 = vsub.s32 32, %v2376
        %v2378 = vshll.u32 %v2369, %v2376
        %v2379 = vshrl.u32 %v2361, %v2377
        %v2380 = vor.u32 %v2378, %v2379
        %v2381 = vsub.s32 4294967266, %v2376
        %v2382 = vadd.s32 %v2381, 127
        %v2383 = vshll.u32 %v2382, 23
        %v2384 = vor.u32 4788187, %v2383
        %v2385 = vand.u32 2147483647, %v2384
        %v2387 = vcvt.s32.f32 %v2380
        %v2388 = vmul.f32 %v2387, %v2385
        %v2389 = vxor.u32 %v2388, 2147483648
        %v2390 = vsel %vm2269, %v2389, %v2388
        %v2391 = vsub.s32 4, %v2367
        %v2392 = vsel %vm2269, %v2391, %v2367
        %v2393 = vsel %vm2268, %v409, %v2390
        %v2394 = vsel %vm2268, 0, %v2392
        %v2395 = vmul.f32 %v2393, %v2393
        %v2396 = vmul.f32 %v2395, -0.001358992
        %v2397 = vadd.f32 %v2396, 0.041655596
        %v2398 = vmul.f32 %v2395, %v2397
        %v2399 = vadd.f32 %v2398, -0.4999988
        %v2400 = vmul.f32 %v2395, %v2399
        %v2401 = vadd.f32 1.0, %v2400
        %v2402 = vmul.f32 %v2393, %v2393
        %v2403 = vmul.f32 %v2402, -0.00019511016
        %v2404 = vadd.f32 %v2403, 0.008332121
        %v2405 = vmul.f32 %v2402, %v2404
        %v2406 = vadd.f32 %v2405, -0.16666654
        %v2407 = vmul.f32 %v2402, %v2406
        %v2408 = vadd.f32 %v2407, 1.0
        %v2409 = vmul.f32 %v2408, %v2393
        %vm2410 = vweird.f32 %v409
        %v2411 = vand.u32 %v2394, 3
        %vm2412 = vcmp.lt.s32.totalorder %v2411, 2
        %vm2413 = vcmp.eq.s32.totalorder %v2411, 0
        %v2414 = vxor.u32 %v2409, 2147483648
        %v2415 = vsel %vm2413, %v2401, %v2414
        %vm2416 = vcmp.eq.s32.totalorder %v2411, 2
        %v2417 = vxor.u32 %v2401, 2147483648
        %v2418 = vsel %vm2416, %v2417, %v2409
        %v2419 = vsel %vm2412, %v2415, %v2418
        %v2420 = vsel %vm2410, nan, %v2419
        %v2421 = vand.u32 2147483647, %v410
        %vm2422 = vcmp.le.f32.partialorder %v2421, 0.7853982
        %vm2423 = vcmp.lt.s32.totalorder %v410, 0
        %v2424 = vand.u32 %v410, 2139095040
        %v2425 = vshrl.u32 %v2424, 23
        %v2426 = vsub.s32 %v2425, 127
        %v2427 = vand.u32 2147483647, %v410
        %v2428 = vand.u32 %v2427, 8388607
        %v2429 = vor.u32 %v2428, 8388608
        %v2430 = vsub.s32 0, %v2429
        %v2431 = vadd.s32 %v2426, 1
        %vm2432 = vcmp.gt.s32.totalorder %v2431, 0
        %v2433 = vsel %vm2432, %v2431, 0
        %v2434 = vshrl.u32 %v2433, 5
        %v2435 = vand.u32 %v2433, 31
        %v2436 = vsub.s32 32, %v2435
        %v2437 = vshrl.u32 683565275, %v2436
        %v2438 = vshll.u32 683565275, %v2435
        %v2439 = vshrl.u32 2475754826, %v2436
        %v2440 = vor.u32 %v2438, %v2439
        %v2441 = vshll.u32 2475754826, %v2435
        %v2442 = vshrl.u32 2131351028, %v2436
        %v2443 = vor.u32 %v2441, %v2442
        %v2444 = vshll.u32 2131351028, %v2435
        %v2445 = vshrl.u32 2102212464, %v2436
        %v2446 = vor.u32 %v2444, %v2445
        %v2447 = vshll.u32 2102212464, %v2435
        %v2448 = vshrl.u32 920167782, %v2436
        %v2449 = vor.u32 %v2447, %v2448
        %v2450 = vshll.u32 920167782, %v2435
        %v2451 = vshrl.u32 1326507024, %v2436
        %v2452 = vor.u32 %v2450, %v2451
        %vm2453 = vcmp.lt.s32.totalorder %v2434, 1
        %vm2454 = vcmp.lt.s32.totalorder %v2434, 2
        %vm2455 = vcmp.lt.s32.totalorder %v2434, 3
        %vm2456 = vcmp.lt.s32.totalorder %v2434, 4
        %v2457 = vsel %vm2453, %v2437, %v2440
        %v2458 = vsel %vm2456, %v2446, 2102212464
        %v2459 = vsel %vm2455, %v2443, %v2458
        %v2460 = vsel %vm2454, %v2457, %v2459
        %v2461 = vsel %vm2453, %v2440, %v2443
        %v2462 = vsel %vm2456, %v2449, 920167782
        %v2463 = vsel %vm2455, %v2446, %v2462
        %v2464 = vsel %vm2454, %v2461, %v2463
        %v2465 = vsel %vm2453, %v2443, %v2446
        %v2466 = vsel %vm2456, %v2452, 1326507024
        %v2467 = vsel %vm2455, %v2449, %v2466
        %v2468 = vsel %vm2454, %v2465, %v2467
        %v2469 = vshll.u32 %v2429, 8
        %v2470 = vand.u32 %v2469, 65535
        %v2471 = vshrl.u32 %v2469, 16
        %v2472 = vand.u32 %v2468, 65535
        %v2473 = vshrl.u32 %v2468, 16
        %v2474 = vmul.u32 %v2470, %v2472
        %v2475 = vmul.u32 %v2470, %v2473
        %v2476 = vmul.u32 %v2471, %v2472
        %v2477 = vmul.u32 %v2471, %v2473
        %v2478 = vshll.u32 %v2475, 16
        %v2479 = vshrl.u32 %v2475, 16
        %v2480 = vshll.u32 %v2476, 16
        %v2481 = vshrl.u32 %v2476, 16
        %vm2482 = vc.u32 %v2474, %v2478
        %v2483 = vsel %vm2482, 1, 0
        %v2484 = vadd.s32 %v2474, %v2478
        %v2485 = vadd.s32 %v2477, %v2483
        %vm2486 = vc.u32 %v2484, %v2480
        %v2487 = vsel %vm2486, 1, 0
        %v2488 = vadd.s32 %v2484, %v2480
        %v2489 = vadd.s32 %v2485, %v2487
        %v2490 = vadd.s32 %v2489, %v2479
        %v2491 = vadd.s32 %v2490, %v2481
        %v2492 = vand.u32 %v2469, 65535
        %v2493 = vshrl.u32 %v2469, 16
        %v2494 = vand.u32 %v2464, 65535
        %v2495 = vshrl.u32 %v2464, 16
        %v2496 = vmul.u32 %v2492, %v2494
        %v2497 = vmul.u32 %v2492, %v2495
        %v2498 = vmul.u32 %v2493, %v2494
        %v2499 = vmul.u32 %v2493, %v2495
        %v2500 = vshll.u32 %v2497, 16
        %v2501 = vshrl.u32 %v2497, 16
        %v2502 = vshll.u32 %v2498, 16
        %v2503 = vshrl.u32 %v2498, 16
        %vm2504 = vc.u32 %v2496, %v2500
        %v2505 = vsel %vm2504, 1, 0
        %v2506 = vadd.s32 %v2496, %v2500
        %v2507 = vadd.s32 %v2499, %v2505
        %vm2508 = vc.u32 %v2506, %v2502
        %v2509 = vsel %vm2508, 1, 0
        %v2510 = vadd.s32 %v2506, %v2502
        %v2511 = vadd.s32 %v2507, %v2509
        %v2512 = vadd.s32 %v2511, %v2501
        %v2513 = vadd.s32 %v2512, %v2503
        %v2514 = vmul.u32 %v2469, %v2460
        %v2515 = vadd.s32 %v2491, %v2510
        %vm2516 = vc.u32 %v2491, %v2510
        %v2517 = vadd.s32 %v2513, 1
        %v2518 = vsel %vm2516, %v2517, %v2513
        %v2519 = vadd.s32 %v2514, %v2518
        %v2520 = vadd.s32 %v2519, 536870912
        %v2521 = vshrl.u32 %v2520, 30
        %v2522 = vshll.u32 %v2521, 30
        %v2523 = vsub.s32 %v2519, %v2522
        %vm2524 = vcmp.lt.s32.totalorder %v2523, 0
        %v2525 = vsub.s32 0, %v2523
        %v2526 = vsel %vm2524, %v2525, %v2523
        %v2527 = vclz %v2526
        %v2528 = vsub.s32 %v2527, 2
        %vm2529 = vcmp.gt.s32.totalorder 0, %v2528
        %v2530 = vsel %vm2529, 0, %v2528
        %v2531 = vsub.s32 32, %v2530
        %v2532 = vshll.u32 %v2523, %v2530
        %v2533 = vshrl.u32 %v2515, %v2531
        %v2534 = vor.u32 %v2532, %v2533
        %v2535 = vsub.s32 4294967266, %v2530
        %v2536 = vadd.s32 %v2535, 127
        %v2537 = vshll.u32 %v2536, 23
        %v2538 = vor.u32 4788187, %v2537
        %v2539 = vand.u32 2147483647, %v2538
        %v2541 = vcvt.s32.f32 %v2534
        %v2542 = vmul.f32 %v2541, %v2539
        %v2543 = vxor.u32 %v2542, 2147483648
        %v2544 = vsel %vm2423, %v2543, %v2542
        %v2545 = vsub.s32 4, %v2521
        %v2546 = vsel %vm2423, %v2545, %v2521
        %v2547 = vsel %vm2422, %v410, %v2544
        %v2548 = vsel %vm2422, 0, %v2546
        %v2549 = vmul.f32 %v2547, %v2547
        %v2550 = vmul.f32 %v2549, -0.001358992
        %v2551 = vadd.f32 %v2550, 0.041655596
        %v2552 = vmul.f32 %v2549, %v2551
        %v2553 = vadd.f32 %v2552, -0.4999988
        %v2554 = vmul.f32 %v2549, %v2553
        %v2555 = vadd.f32 1.0, %v2554
        %v2556 = vmul.f32 %v2547, %v2547
        %v2557 = vmul.f32 %v2556, -0.00019511016
        %v2558 = vadd.f32 %v2557, 0.008332121
        %v2559 = vmul.f32 %v2556, %v2558
        %v2560 = vadd.f32 %v2559, -0.16666654
        %v2561 = vmul.f32 %v2556, %v2560
        %v2562 = vadd.f32 %v2561, 1.0
        %v2563 = vmul.f32 %v2562, %v2547
        %vm2564 = vweird.f32 %v410
        %v2565 = vand.u32 %v2548, 3
        %vm2566 = vcmp.lt.s32.totalorder %v2565, 2
        %vm2567 = vcmp.eq.s32.totalorder %v2565, 0
        %v2568 = vxor.u32 %v2563, 2147483648
        %v2569 = vsel %vm2567, %v2555, %v2568
        %vm2570 = vcmp.eq.s32.totalorder %v2565, 2
        %v2571 = vxor.u32 %v2555, 2147483648
        %v2572 = vsel %vm2570, %v2571, %v2563
        %v2573 = vsel %vm2566, %v2569, %v2572
        %v2574 = vsel %vm2564, nan, %v2573
        %v2575 = vsel %vm411, 1, 0
        %v2576 = vperm.slane %v2575, 6
        %vm2577 = vcmp.eq.s32.totalorder %v2576, 1
        %v2578 = vsel %vm2577, %v566, %v1650
        %v2579 = vsel %vm2577, %v721, %v1804
        %v2580 = vsel %vm2577, %v876, %v1958
        %v2581 = vsel %vm2577, %v1031, %v2112
        %v2582 = vsel %vm2577, %v1186, %v2266
        %v2583 = vsel %vm2577, %v1341, %v2420
        %v2584 = vsel %vm2577, %v1496, %v2574
        %v2585 = vperm.slane %v2575, 7
        %vm2586 = vcmp.eq.s32.totalorder %v2585, 1
        %v2587 = vsel %vm2586, %v404, %v2578
        %v2588 = vsel %vm2586, %v405, %v2579
        %v2589 = vsel %vm2586, %v406, %v2580
        %v2590 = vsel %vm2586, %v407, %v2581
        %v2591 = vsel %vm2586, %v408, %v2582
        %v2592 = vsel %vm2586, %v409, %v2583
        %v2593 = vsel %vm2586, %v410, %v2584
        %vm2594 = vcmask 1031168
        %2595 = vst.msk [vmem:[%s137] sm:$0xff] %vm2594, %v2587
        %2596 = vst.msk [vmem:[%s137 + $0x8] sm:$0xff] %vm2594, %v2588
        %2597 = vst.msk [vmem:[%s137 + $0x10] sm:$0xff] %vm2594, %v2589
        %2598 = vst.msk [vmem:[%s137 + $0x18] sm:$0xff] %vm2594, %v2590
        %2599 = vst.msk [vmem:[%s137 + $0x20] sm:$0xff] %vm2594, %v2591
        %2600 = vst.msk [vmem:[%s137 + $0x28] sm:$0xff] %vm2594, %v2592
        %2601 = vst.msk [vmem:[%s137 + $0x30] sm:$0xff] %vm2594, %v2593
        %s2602 = sand.u32 %s71, 1
        %s2603 = scalar_lea.sflag [#allocation3], %s2602
        %s2604 = sand.u32 %s71, 1
        %s2605 = smul.addr %s2604, 56
        %s2606 = scalar_lea.vmem [#allocation2], %s2605
        // Predicated region
        $region29: #{tpu_custom_call.1} parent=27 // pred_check
          %p2607 = pneg %p81
        $region30: #{tpu_custom_call.1} parent=27 // pred_check_branch
          %2609 = sbr.rel (%p2607) target = $region32
        $region31: #{tpu_custom_call.1} parent=27 // pred_region
          %s2610 = smul.u32 7, %s16
          %2612 = vsyncadd %s2603, 0
          %s2613 = smul.addr %s2610, 8
          %s2614 = scalar_lea.hbm %s2, %s2613
          %s2615 = sshll.u32 %s2606, 4
          %s2616 = int_to_ptr.vmem [resolvable:$true] %s2615
          %s2617 = sshll.u32 %s2614, 4
          %s2618 = int_to_ptr.hbm [resolvable:$true] %s2617
          %2623 = dma.vmem_to_hbm [thread:$0]  %s2616, 896, %s2618, %s2603, 128, 128, 8
        $region32: #{tpu_custom_call.1} parent=27 // pred_fallthru
          _
      $region28: #{tpu_custom_call.1} parent=5 // pred_fallthru
        _
      %p2624 = scmp.le.s32.totalorder 2, %s11
      // Predicated region
      $region33: #{tpu_custom_call.1} parent=5 // pred_check
        %p2625 = pneg %p2624
      $region34: #{tpu_custom_call.1} parent=5 // pred_check_branch
        %2627 = sbr.rel (%p2625) target = $region36
      $region35: #{tpu_custom_call.1} parent=5 // pred_region
        %s2628 = ssub.s32 %s11, 2
        // Predicated region
        $region37: #{tpu_custom_call.1} parent=35 // pred_check
          %p2629 = pneg %p87
        $region38: #{tpu_custom_call.1} parent=35 // pred_check_branch
          %2631 = sbr.rel (%p2629) target = $region40
        $region39: #{tpu_custom_call.1} parent=35 // pred_region
          %s2632 = sand.u32 %s72, 1
          %s2633 = scalar_lea.sflag [#allocation3], %s2632
          %s2634 = sand.u32 %s72, 1
          %s2635 = smul.addr %s2634, 56
          %s2636 = scalar_lea.vmem [#allocation2], %s2635
          %2638 = dma.done %s2633, 896
        $region40: #{tpu_custom_call.1} parent=35 // pred_fallthru
          _
      $region36: #{tpu_custom_call.1} parent=5 // pred_fallthru
        _
    $region6: #{tpu_custom_call.1} parent=1 // loop_footer
      %s15 = sadd.s32 1, %s11
    $region7: #{tpu_custom_call.1} parent=1 // loop_footer_branch
      %10 = sbr.rel target = $region3
    $region8: #{tpu_custom_call.1} parent=1 // loop_exit
      _
    %2639 = vsyncpa [#allocation3], 1
    %s2640 = scalar_lea.sflag [#allocation3], 1
    %2641 = vsyncpa %s2640, 1

</llo_original>
